<compile_context>
chip_gen: v7x
topology: tpu7x:2x2x1
jax: 0.10.0
libtpu: 0.0.40
codegen_flags: <defaults>
</compile_context>

<pallas_src>
import jax
import jax.numpy as jnp
import numpy as np
from jax.experimental import pallas as pl
from jax.experimental.pallas import tpu as pltpu

PAD_ID = 0


def _utterance_embed_kernel(ids_ref, table_ref, out_ref):
    ids = ids_ref[...]                                    # (TN, W) int32
    tn, w = ids.shape
    vocab = table_ref.shape[0]

    # Per-node vocab weights: weights[n, v] = #{w : ids[n, w] == v, non-pad}.
    # Static Python loop over W (small, static) so no (TN, W, V) intermediate
    # is ever materialized — live set stays at one (TN, V) accumulator.
    vocab_iota = jax.lax.broadcasted_iota(jnp.int32, (tn, vocab), 1)
    weights = jnp.zeros((tn, vocab), jnp.float32)
    for wi in range(w):
        col = ids[:, wi:wi + 1]                           # (TN, 1)
        hit = jnp.logical_and(vocab_iota == col, col != PAD_ID)
        weights = weights + hit.astype(jnp.float32)

    # Word counts come from the pad mask (so out-of-vocab ids still count,
    # matching the original semantics); all-pad rows divide by 1 -> zeros.
    mask = (ids != PAD_ID).astype(jnp.float32)            # (TN, W)
    counts = jnp.maximum(jnp.sum(mask, axis=-1, keepdims=True), 1.0)
    inv_counts = pl.reciprocal(counts, approx=True)       # EUP, not VALU
    weights = weights * inv_counts                        # (TN, V)

    # Single lane-dense MXU matmul: (TN, V) @ (V, E) -> (TN, E).
    out_ref[...] = jnp.dot(
        weights, table_ref[...], preferred_element_type=jnp.float32
    ).astype(out_ref.dtype)


def stupid_embedder_forward(token_ids, emb_table, *, tile_n=128):
    """token_ids: (N, W) int32; emb_table: (V, E) f32 -> (N, E) f32."""
    n, w = token_ids.shape
    v, e = emb_table.shape

    # Pad the node axis up to a multiple of tile_n with all-PAD rows (they
    # produce zero vectors and are sliced off afterwards).
    num_tiles = pl.cdiv(n, tile_n)
    n_pad = num_tiles * tile_n
    if n_pad != n:
        token_ids = jnp.pad(token_ids, ((0, n_pad - n), (0, 0)),
                            constant_values=PAD_ID)

    out = pl.pallas_call(
        _utterance_embed_kernel,
        out_shape=jax.ShapeDtypeStruct((n_pad, e), jnp.float32),
        grid_spec=pltpu.PrefetchScalarGridSpec(
            num_scalar_prefetch=0,
            grid=(num_tiles,),
            in_specs=[
                # Token-id tile, pipelined over the node axis.
                pl.BlockSpec((tile_n, w), lambda i: (i, 0)),
                # Embedding table: single resident VMEM copy, no per-step
                # double buffering (halves table VMEM; matters on v7x).
                pl.BlockSpec(memory_space=pltpu.MemorySpace.VMEM),
            ],
            out_specs=pl.BlockSpec((tile_n, e), lambda i: (i, 0)),
        ),
        compiler_params=pltpu.CompilerParams(
            dimension_semantics=("parallel",),
            vmem_limit_bytes=32 * 1024 * 1024,
        ),
    )(token_ids, emb_table)

    return out[:n]


def _reference(token_ids, emb_table):
    emb = emb_table[token_ids]                            # (N, W, E)
    mask = (token_ids != PAD_ID).astype(jnp.float32)      # (N, W)
    counts = jnp.maximum(mask.sum(-1, keepdims=True), 1.0)
    return (emb * mask[..., None]).sum(1) / counts


if __name__ == "__main__":
    # Small shapes consistent with the module; num_nodes deliberately not a
    # multiple of tile_n to exercise the cdiv/padding path, and large enough
    # that the grid has 2 steps (keeps both v7x TensorCores busy).
    num_nodes = 200        # batch of Nodes
    max_words = 8          # utterance_embedder.max_words
    vocab = 128            # token vocabulary size
    embed_dim = 128        # utterance_embedder.embed_dim (== forward output dim)
    target_dim = 32        # self._dim for the (unused-in-forward) fc layer

    key = jax.random.PRNGKey(0)
    k_tab, k_ids, k_len, k_fc = jax.random.split(key, 4)

    # Deterministic parameters.
    emb_table = jax.random.normal(k_tab, (vocab, embed_dim), dtype=jnp.float32)
    # fc / dropout exist in __init__ but are not used by forward(); params kept
    # only to mirror the module's parameter shapes.
    fc_w = jax.random.normal(k_fc, (target_dim, embed_dim), dtype=jnp.float32) * 0.02
    fc_b = jnp.zeros((target_dim,), dtype=jnp.float32)
    del fc_w, fc_b  # TODO(synk): fc/dropout are defined but never applied in forward().

    # Deterministic tokenized node texts, padded with PAD_ID=0.
    raw_ids = jax.random.randint(k_ids, (num_nodes, max_words), 1, vocab,
                                 dtype=jnp.int32)
    lengths = jax.random.randint(k_len, (num_nodes, 1), 1, max_words + 1,
                                 dtype=jnp.int32)
    word_pos = jnp.arange(max_words, dtype=jnp.int32)[None, :]
    token_ids = jnp.where(word_pos < lengths, raw_ids, PAD_ID)

    out = stupid_embedder_forward(token_ids, emb_table)
    out = jax.block_until_ready(out)

    ref = _reference(token_ids, emb_table)
    # Tolerance loosened slightly to accommodate pl.reciprocal(approx=True).
    np.testing.assert_allclose(np.asarray(out), np.asarray(ref),
                               rtol=2e-3, atol=2e-3)
    assert out.shape == (num_nodes, embed_dim)
    print("KERNEL_OK")
</pallas_src>

<mosaic_0001>
module attributes {stable_mosaic.version = 11 : i64} {
  func.func @_utterance_embed_kernel(%arg0: i32, %arg1: memref<128x8xi32, #tpu.memory_space<vmem>>, %arg2: memref<128x128xf32, #tpu.memory_space<vmem>>, %arg3: memref<128x128xf32, #tpu.memory_space<vmem>>) attributes {dimension_semantics = [#tpu.dimension_semantics<parallel>], iteration_bounds = array<i64: 2>, scalar_prefetch = 0 : i64, scratch_operands = 0 : i64, tpu.core_type = #tpu.core_type<tc>, window_params = [{transform_indices = @transform_0, window_bounds = array<i64: 128, 8>}, {pipeline_mode = #tpu.pipeline_mode<synchronous>, transform_indices = @transform_1, window_bounds = array<i64: 128, 128>}, {transform_indices = @transform_2, window_bounds = array<i64: 128, 128>}]} {
    %c0 = arith.constant 0 : index
    %c0_0 = arith.constant 0 : index
    %0 = vector.load %arg1[%c0, %c0_0] : memref<128x8xi32, #tpu.memory_space<vmem>>, vector<128x8xi32>
    %1 = tpu.iota {dimensions = array<i32: 1>} : vector<128x128xi32>
    %cst = arith.constant 0.000000e+00 : f32
    %2 = vector.broadcast %cst : f32 to vector<128x128xf32>
    %3 = vector.extract_strided_slice %0 {offsets = [0, 0], sizes = [128, 1], strides = [1, 1]} : vector<128x8xi32> to vector<128x1xi32>
    %4 = vector.broadcast %3 : vector<128x1xi32> to vector<128x128xi32>
    %5 = arith.cmpi eq, %1, %4 : vector<128x128xi32>
    %c0_i32 = arith.constant 0 : i32
    %6 = vector.broadcast %c0_i32 : i32 to vector<128x1xi32>
    %7 = arith.cmpi ne, %3, %6 : vector<128x1xi32>
    %8 = vector.broadcast %7 : vector<128x1xi1> to vector<128x128xi1>
    %9 = arith.andi %5, %8 : vector<128x128xi1>
    %10 = arith.extui %9 : vector<128x128xi1> to vector<128x128xi32>
    %11 = arith.sitofp %10 : vector<128x128xi32> to vector<128x128xf32>
    %12 = arith.addf %2, %11 : vector<128x128xf32>
    %13 = vector.extract_strided_slice %0 {offsets = [0, 1], sizes = [128, 1], strides = [1, 1]} : vector<128x8xi32> to vector<128x1xi32>
    %14 = vector.broadcast %13 : vector<128x1xi32> to vector<128x128xi32>
    %15 = arith.cmpi eq, %1, %14 : vector<128x128xi32>
    %c0_i32_1 = arith.constant 0 : i32
    %16 = vector.broadcast %c0_i32_1 : i32 to vector<128x1xi32>
    %17 = arith.cmpi ne, %13, %16 : vector<128x1xi32>
    %18 = vector.broadcast %17 : vector<128x1xi1> to vector<128x128xi1>
    %19 = arith.andi %15, %18 : vector<128x128xi1>
    %20 = arith.extui %19 : vector<128x128xi1> to vector<128x128xi32>
    %21 = arith.sitofp %20 : vector<128x128xi32> to vector<128x128xf32>
    %22 = arith.addf %12, %21 : vector<128x128xf32>
    %23 = vector.extract_strided_slice %0 {offsets = [0, 2], sizes = [128, 1], strides = [1, 1]} : vector<128x8xi32> to vector<128x1xi32>
    %24 = vector.broadcast %23 : vector<128x1xi32> to vector<128x128xi32>
    %25 = arith.cmpi eq, %1, %24 : vector<128x128xi32>
    %c0_i32_2 = arith.constant 0 : i32
    %26 = vector.broadcast %c0_i32_2 : i32 to vector<128x1xi32>
    %27 = arith.cmpi ne, %23, %26 : vector<128x1xi32>
    %28 = vector.broadcast %27 : vector<128x1xi1> to vector<128x128xi1>
    %29 = arith.andi %25, %28 : vector<128x128xi1>
    %30 = arith.extui %29 : vector<128x128xi1> to vector<128x128xi32>
    %31 = arith.sitofp %30 : vector<128x128xi32> to vector<128x128xf32>
    %32 = arith.addf %22, %31 : vector<128x128xf32>
    %33 = vector.extract_strided_slice %0 {offsets = [0, 3], sizes = [128, 1], strides = [1, 1]} : vector<128x8xi32> to vector<128x1xi32>
    %34 = vector.broadcast %33 : vector<128x1xi32> to vector<128x128xi32>
    %35 = arith.cmpi eq, %1, %34 : vector<128x128xi32>
    %c0_i32_3 = arith.constant 0 : i32
    %36 = vector.broadcast %c0_i32_3 : i32 to vector<128x1xi32>
    %37 = arith.cmpi ne, %33, %36 : vector<128x1xi32>
    %38 = vector.broadcast %37 : vector<128x1xi1> to vector<128x128xi1>
    %39 = arith.andi %35, %38 : vector<128x128xi1>
    %40 = arith.extui %39 : vector<128x128xi1> to vector<128x128xi32>
    %41 = arith.sitofp %40 : vector<128x128xi32> to vector<128x128xf32>
    %42 = arith.addf %32, %41 : vector<128x128xf32>
    %43 = vector.extract_strided_slice %0 {offsets = [0, 4], sizes = [128, 1], strides = [1, 1]} : vector<128x8xi32> to vector<128x1xi32>
    %44 = vector.broadcast %43 : vector<128x1xi32> to vector<128x128xi32>
    %45 = arith.cmpi eq, %1, %44 : vector<128x128xi32>
    %c0_i32_4 = arith.constant 0 : i32
    %46 = vector.broadcast %c0_i32_4 : i32 to vector<128x1xi32>
    %47 = arith.cmpi ne, %43, %46 : vector<128x1xi32>
    %48 = vector.broadcast %47 : vector<128x1xi1> to vector<128x128xi1>
    %49 = arith.andi %45, %48 : vector<128x128xi1>
    %50 = arith.extui %49 : vector<128x128xi1> to vector<128x128xi32>
    %51 = arith.sitofp %50 : vector<128x128xi32> to vector<128x128xf32>
    %52 = arith.addf %42, %51 : vector<128x128xf32>
    %53 = vector.extract_strided_slice %0 {offsets = [0, 5], sizes = [128, 1], strides = [1, 1]} : vector<128x8xi32> to vector<128x1xi32>
    %54 = vector.broadcast %53 : vector<128x1xi32> to vector<128x128xi32>
    %55 = arith.cmpi eq, %1, %54 : vector<128x128xi32>
    %c0_i32_5 = arith.constant 0 : i32
    %56 = vector.broadcast %c0_i32_5 : i32 to vector<128x1xi32>
    %57 = arith.cmpi ne, %53, %56 : vector<128x1xi32>
    %58 = vector.broadcast %57 : vector<128x1xi1> to vector<128x128xi1>
    %59 = arith.andi %55, %58 : vector<128x128xi1>
    %60 = arith.extui %59 : vector<128x128xi1> to vector<128x128xi32>
    %61 = arith.sitofp %60 : vector<128x128xi32> to vector<128x128xf32>
    %62 = arith.addf %52, %61 : vector<128x128xf32>
    %63 = vector.extract_strided_slice %0 {offsets = [0, 6], sizes = [128, 1], strides = [1, 1]} : vector<128x8xi32> to vector<128x1xi32>
    %64 = vector.broadcast %63 : vector<128x1xi32> to vector<128x128xi32>
    %65 = arith.cmpi eq, %1, %64 : vector<128x128xi32>
    %c0_i32_6 = arith.constant 0 : i32
    %66 = vector.broadcast %c0_i32_6 : i32 to vector<128x1xi32>
    %67 = arith.cmpi ne, %63, %66 : vector<128x1xi32>
    %68 = vector.broadcast %67 : vector<128x1xi1> to vector<128x128xi1>
    %69 = arith.andi %65, %68 : vector<128x128xi1>
    %70 = arith.extui %69 : vector<128x128xi1> to vector<128x128xi32>
    %71 = arith.sitofp %70 : vector<128x128xi32> to vector<128x128xf32>
    %72 = arith.addf %62, %71 : vector<128x128xf32>
    %73 = vector.extract_strided_slice %0 {offsets = [0, 7], sizes = [128, 1], strides = [1, 1]} : vector<128x8xi32> to vector<128x1xi32>
    %74 = vector.broadcast %73 : vector<128x1xi32> to vector<128x128xi32>
    %75 = arith.cmpi eq, %1, %74 : vector<128x128xi32>
    %c0_i32_7 = arith.constant 0 : i32
    %76 = vector.broadcast %c0_i32_7 : i32 to vector<128x1xi32>
    %77 = arith.cmpi ne, %73, %76 : vector<128x1xi32>
    %78 = vector.broadcast %77 : vector<128x1xi1> to vector<128x128xi1>
    %79 = arith.andi %75, %78 : vector<128x128xi1>
    %80 = arith.extui %79 : vector<128x128xi1> to vector<128x128xi32>
    %81 = arith.sitofp %80 : vector<128x128xi32> to vector<128x128xf32>
    %82 = arith.addf %72, %81 : vector<128x128xf32>
    %c0_i32_8 = arith.constant 0 : i32
    %83 = vector.broadcast %c0_i32_8 : i32 to vector<128x8xi32>
    %84 = arith.cmpi ne, %0, %83 : vector<128x8xi32>
    %85 = arith.extui %84 : vector<128x8xi1> to vector<128x8xi32>
    %86 = arith.sitofp %85 : vector<128x8xi32> to vector<128x8xf32>
    %cst_9 = arith.constant dense<0.000000e+00> : vector<128xf32>
    %87 = vector.multi_reduction <add>, %86, %cst_9 [1] : vector<128x8xf32> to vector<128xf32>
    %88 = vector.shape_cast %87 : vector<128xf32> to vector<128x1xf32>
    %cst_10 = arith.constant 1.000000e+00 : f32
    %89 = vector.broadcast %cst_10 : f32 to vector<128x1xf32>
    %90 = arith.maximumf %88, %89 : vector<128x1xf32>
    %91 = tpu.reciprocal %90 {approx = true} : vector<128x1xf32> -> vector<128x1xf32>
    %92 = vector.broadcast %91 : vector<128x1xf32> to vector<128x128xf32>
    %93 = arith.mulf %82, %92 : vector<128x128xf32>
    %c0_11 = arith.constant 0 : index
    %c0_12 = arith.constant 0 : index
    %94 = vector.load %arg2[%c0_11, %c0_12] : memref<128x128xf32, #tpu.memory_space<vmem>>, vector<128x128xf32>
    %cst_13 = arith.constant dense<0.000000e+00> : vector<128x128xf32>
    %95 = tpu.matmul %93, %94, %cst_13 {dimension_numbers = #tpu.dot_dimension_numbers<[1], [0], [0], [1], [0, 0, 1, 1], [], []>} : vector<128x128xf32>, vector<128x128xf32>, vector<128x128xf32> -> vector<128x128xf32>
    %c0_14 = arith.constant 0 : index
    %c0_15 = arith.constant 0 : index
    %96 = vector.load %arg3[%c0_14, %c0_15] : memref<128x128xf32, #tpu.memory_space<vmem>>, vector<128x128xf32>
    tpu.vector_store %arg3[%c0_14, %c0_15], %95 {strides = array<i32>} : memref<128x128xf32, #tpu.memory_space<vmem>>, vector<128x128xf32>,
    return
  }
  func.func @transform_0(%arg0: i32) -> (i32, i32) {
    %c0_i32 = arith.constant 0 : i32
    %c0_i32_0 = arith.constant 0 : i32
    return %arg0, %c0_i32 : i32, i32
  }
  func.func @transform_1(%arg0: i32) -> (i32, i32) {
    %c0_i32 = arith.constant 0 : i32
    %c0_i32_0 = arith.constant 0 : i32
    %c0_i32_1 = arith.constant 0 : i32
    return %c0_i32, %c0_i32_0 : i32, i32
  }
  func.func @transform_2(%arg0: i32) -> (i32, i32) {
    %c0_i32 = arith.constant 0 : i32
    %c0_i32_0 = arith.constant 0 : i32
    return %arg0, %c0_i32 : i32, i32
  }
}

</mosaic_0001>

<llo_original>
// kernel: tpu_custom_call.1
$region0: #{tpu_custom_call.1}
  #allocation0 [shape = 'u32[]', space=smem, size = 0x4, offset = 0x4, fixed_abs, tag = 'smem constant byte address 0x4 - core index']
  #allocation1 [shape = 'u32[144,128]{1,0:T(1,128)}', space=vmem, size = 0x12000, scoped, tag = 'internal scratch']
  %s0 = inlined_call_operand.vmem [shape: s32[256,8], index: 0, kind: input, shape index: {}]
  %s1 = inlined_call_operand.vmem [shape: f32[128,128], index: 1, kind: input, shape index: {}]
  %s2 = inlined_call_operand.hbm [shape: f32[256,128], index: 2, kind: output, shape index: {}]
  %s3 = sld [smem:[#allocation0]]
  $region41: #{tpu_custom_call.1} parent=0
    _
  %s5 = ssub.s32 1, %s3
  %s6 = scalar_select 0, %s5, %s3
  $region1: #{tpu_custom_call.1} parent=0
    #allocation2 [shape = 'u8[131072]{0}', space=vmem, size = 0x20000, scoped, tag = 'output window, operand 0']
    #allocation3 [shape = 's32[2]{0}', space=sflag, size = 0x8, scoped, tag = 'scoped memory for tpu_custom_call.1']
    %7 = vsyncpa [#allocation3], 0
    %s8 = scalar_lea.sflag [#allocation3], 1
    %9 = vsyncpa %s8, 0
    loop: start=0, step=1, limit=4
    $region2: #{tpu_custom_call.1} parent=1 // loop_pre_header
      _
    $region3: #{tpu_custom_call.1} parent=1 // loop_header
      %s11 = sphi 0, %s15
      %p12 = scmp.ge.s32.totalorder %s11, 4
      %s21 = sphi 0, %s23
      %s24 = sphi 0, %s21
      %s25 = sphi 0, %s24
      %s41 = sphi 0, %s25
      %s45 = sphi 0, %s45
      %s47 = sphi 0, %s45
      %s48 = sphi 0, %s47
      %s62 = sphi 0, %s48
      %s68 = sphi 0, %s70
      %s71 = sphi 0, %s68
      %s72 = sphi 0, %s71
      %s88 = sphi 0, %s72
    $region4: #{tpu_custom_call.1} parent=1 // loop_header_branch
      %14 = sbr.rel (%p12) target = $region8
    $region5: #{tpu_custom_call.1} parent=1 // loop_body
      %s16 = ssub.s32 %s11, 1
      %s17 = ssub.s32 %s11, 2
      %s18 = sadd.s32 %s11, 1
      %s19 = ssub.s32 %s11, %s18
      %p20 = scmp.eq.s32.totalorder %s19, 0
      %s22 = sadd.s32 %s21, 1
      %s23 = scalar_select %p20, %s21, %s22
      %p26 = pneg %p20
      %p27 = scmp.eq.s32.totalorder %s11, 1
      %p28 = por %p26, %p27
      %p29 = scmp.ne.s32.totalorder %s21, %s24
      %p30 = scmp.eq.s32.totalorder %s11, 0
      %p31 = por %p29, %p30
      %p32 = scmp.ne.s32.totalorder %s21, %s24
      %p33 = scmp.eq.s32.totalorder %s16, 1
      %p34 = por %p32, %p33
      %p35 = scmp.ne.s32.totalorder %s24, %s25
      %p36 = scmp.eq.s32.totalorder %s16, 0
      %p37 = por %p35, %p36
      %p38 = scmp.ne.s32.totalorder %s24, %s25
      %p39 = scmp.eq.s32.totalorder %s17, 1
      %p40 = por %p38, %p39
      %p42 = scmp.ne.s32.totalorder %s25, %s41
      %p43 = scmp.eq.s32.totalorder %s17, 0
      %p44 = por %p42, %p43
      %s46 = sadd.s32 %s45, 1
      %p49 = scmp.eq.s32.totalorder %s11, 1
      %p50 = scmp.ne.s32.totalorder %s45, %s47
      %p51 = scmp.eq.s32.totalorder %s11, 0
      %p52 = por %p50, %p51
      %p53 = scmp.ne.s32.totalorder %s45, %s47
      %p54 = scmp.eq.s32.totalorder %s16, 1
      %p55 = por %p53, %p54
      %p56 = scmp.ne.s32.totalorder %s47, %s48
      %p57 = scmp.eq.s32.totalorder %s16, 0
      %p58 = por %p56, %p57
      %p59 = scmp.ne.s32.totalorder %s47, %s48
      %p60 = scmp.eq.s32.totalorder %s17, 1
      %p61 = por %p59, %p60
      %p63 = scmp.ne.s32.totalorder %s48, %s62
      %p64 = scmp.eq.s32.totalorder %s17, 0
      %p65 = por %p63, %p64
      %s66 = ssub.s32 %s11, %s18
      %p67 = scmp.eq.s32.totalorder %s66, 0
      %s69 = sadd.s32 %s68, 1
      %s70 = scalar_select %p67, %s68, %s69
      %p73 = pneg %p67
      %p74 = scmp.eq.s32.totalorder %s11, 1
      %p75 = por %p73, %p74
      %p76 = scmp.ne.s32.totalorder %s68, %s71
      %p77 = scmp.eq.s32.totalorder %s11, 0
      %p78 = por %p76, %p77
      %p79 = scmp.ne.s32.totalorder %s68, %s71
      %p80 = scmp.eq.s32.totalorder %s16, 1
      %p81 = por %p79, %p80
      %p82 = scmp.ne.s32.totalorder %s71, %s72
      %p83 = scmp.eq.s32.totalorder %s16, 0
      %p84 = por %p82, %p83
      %p85 = scmp.ne.s32.totalorder %s71, %s72
      %p86 = scmp.eq.s32.totalorder %s17, 1
      %p87 = por %p85, %p86
      %p89 = scmp.ne.s32.totalorder %s72, %s88
      %p90 = scmp.eq.s32.totalorder %s17, 0
      %p91 = por %p89, %p90
      %p92 = scmp.le.s32.totalorder 1, %s11
      %p93 = scmp.lt.s32.totalorder %s11, 3
      %p94 = pnand %p92, %p93
      %p95 = pneg %p94
      // Predicated region
      $region9: #{tpu_custom_call.1} parent=5 // pred_check
        _
      $region10: #{tpu_custom_call.1} parent=5 // pred_check_branch
        %97 = sbr.rel (%p94) target = $region12
      $region11: #{tpu_custom_call.1} parent=5 // pred_region
        %s98 = ssub.s32 %s11, 1
        // Predicated region
        $region13: #{tpu_custom_call.1} parent=11 // pred_check
          %p99 = pneg %p58
        $region14: #{tpu_custom_call.1} parent=11 // pred_check_branch
          %101 = sbr.rel (%p99) target = $region16
        $region15: #{tpu_custom_call.1} parent=11 // pred_region
          _
        $region16: #{tpu_custom_call.1} parent=11 // pred_fallthru
          _
      $region12: #{tpu_custom_call.1} parent=5 // pred_fallthru
        _
      %p102 = scmp.lt.s32.totalorder %s11, 2
      // Predicated region
      $region17: #{tpu_custom_call.1} parent=5 // pred_check
        %p103 = pneg %p102
      $region18: #{tpu_custom_call.1} parent=5 // pred_check_branch
        %105 = sbr.rel (%p103) target = $region20
      $region19: #{tpu_custom_call.1} parent=5 // pred_region
        // Predicated region
        $region21: #{tpu_custom_call.1} parent=19 // pred_check
          %p106 = pneg %p31
        $region22: #{tpu_custom_call.1} parent=19 // pred_check_branch
          %108 = sbr.rel (%p106) target = $region24
        $region23: #{tpu_custom_call.1} parent=19 // pred_region
          %s109 = smul.u32 16, %s11
          %p110 = scmp.lt.s32.totalorder %s109, 31
          %s111 = scalar_select %p110, %s109, 31
          %s112 = smul.addr %s111, 8
          %s113 = scalar_lea.vmem %s0, %s112
          %s114 = smul.u32 16, %s11
        $region24: #{tpu_custom_call.1} parent=19 // pred_fallthru
          _
      $region20: #{tpu_custom_call.1} parent=5 // pred_fallthru
        _
      %p115 = scmp.le.s32.totalorder 1, %s11
      %p116 = scmp.lt.s32.totalorder %s11, 3
      %p117 = pnand %p115, %p116
      %p118 = pneg %p117
      // Predicated region
      $region25: #{tpu_custom_call.1} parent=5 // pred_check
        _
      $region26: #{tpu_custom_call.1} parent=5 // pred_check_branch
        %120 = sbr.rel (%p117) target = $region28
      $region27: #{tpu_custom_call.1} parent=5 // pred_region
        %s121 = ssub.s32 %s11, 1
        %s122 = smul.u32 16, %s16
        %p123 = scmp.lt.s32.totalorder %s122, 31
        %s124 = scalar_select %p123, %s122, 31
        %s125 = smul.addr %s124, 8
        %s126 = scalar_lea.vmem %s0, %s125
        %p127 = pneg %p37
        %p128 = pneg %p34
        %p129 = pneg %p58
        %p130 = pneg %p55
        %p131 = pneg %p84
        %p132 = pneg %p81
        %s133 = sand.u32 %s71, 1
        %s134 = scalar_lea.sflag [#allocation3], %s133
        %s135 = sand.u32 %s71, 1
        %s136 = smul.addr %s135, 128
        %s137 = scalar_lea.vmem [#allocation2], %s136
        %s138 = smul.u32 16, %s16
        %p139 = scmp.lt.s32.totalorder %s138, 31
        %s140 = scalar_select %p139, %s138, 31
        %s141 = smul.addr %s140, 8
        %s142 = scalar_lea.vmem %s0, %s141
        %s143 = smul.u32 16, %s16
        %s144 = smul.u32 16, %s16
        %v145 = vld [vmem:[%s142] sm:$0xff]
        %v146 = vld [vmem:[%s142 + $0x8] sm:$0xff]
        %v147 = vld [vmem:[%s142 + $0x10] sm:$0xff]
        %v148 = vld [vmem:[%s142 + $0x18] sm:$0xff]
        %v149 = vld [vmem:[%s142 + $0x20] sm:$0xff]
        %v150 = vld [vmem:[%s142 + $0x28] sm:$0xff]
        %v151 = vld [vmem:[%s142 + $0x30] sm:$0xff]
        %v152 = vld [vmem:[%s142 + $0x38] sm:$0xff]
        %v153 = vld [vmem:[%s142 + $0x40] sm:$0xff]
        %v154 = vld [vmem:[%s142 + $0x48] sm:$0xff]
        %v155 = vld [vmem:[%s142 + $0x50] sm:$0xff]
        %v156 = vld [vmem:[%s142 + $0x58] sm:$0xff]
        %v157 = vld [vmem:[%s142 + $0x60] sm:$0xff]
        %v158 = vld [vmem:[%s142 + $0x68] sm:$0xff]
        %v159 = vld [vmem:[%s142 + $0x70] sm:$0xff]
        %v160 = vld [vmem:[%s142 + $0x78] sm:$0xff]
        %v161 = vlaneseq
        %v162 = vand.u32 %v161, 127
        %163 = vset.pattern.permute.xlu0 0
        %164 = vperm.xlu0 %163, %v145
        %v165 = vpop.permute.xlu0 %164
        %166 = vset.pattern.permute.xlu0 0
        %167 = vperm.xlu0 %166, %v146
        %v168 = vpop.permute.xlu0 %167
        %169 = vset.pattern.permute.xlu0 0
        %170 = vperm.xlu0 %169, %v147
        %v171 = vpop.permute.xlu0 %170
        %172 = vset.pattern.permute.xlu0 0
        %173 = vperm.xlu0 %172, %v148
        %v174 = vpop.permute.xlu0 %173
        %175 = vset.pattern.permute.xlu0 0
        %176 = vperm.xlu0 %175, %v149
        %v177 = vpop.permute.xlu0 %176
        %178 = vset.pattern.permute.xlu0 0
        %179 = vperm.xlu0 %178, %v150
        %v180 = vpop.permute.xlu0 %179
        %181 = vset.pattern.permute.xlu0 0
        %182 = vperm.xlu0 %181, %v151
        %v183 = vpop.permute.xlu0 %182
        %184 = vset.pattern.permute.xlu0 0
        %185 = vperm.xlu0 %184, %v152
        %v186 = vpop.permute.xlu0 %185
        %187 = vset.pattern.permute.xlu0 0
        %188 = vperm.xlu0 %187, %v153
        %v189 = vpop.permute.xlu0 %188
        %190 = vset.pattern.permute.xlu0 0
        %191 = vperm.xlu0 %190, %v154
        %v192 = vpop.permute.xlu0 %191
        %193 = vset.pattern.permute.xlu0 0
        %194 = vperm.xlu0 %193, %v155
        %v195 = vpop.permute.xlu0 %194
        %196 = vset.pattern.permute.xlu0 0
        %197 = vperm.xlu0 %196, %v156
        %v198 = vpop.permute.xlu0 %197
        %199 = vset.pattern.permute.xlu0 0
        %200 = vperm.xlu0 %199, %v157
        %v201 = vpop.permute.xlu0 %200
        %202 = vset.pattern.permute.xlu0 0
        %203 = vperm.xlu0 %202, %v158
        %v204 = vpop.permute.xlu0 %203
        %205 = vset.pattern.permute.xlu0 0
        %206 = vperm.xlu0 %205, %v159
        %v207 = vpop.permute.xlu0 %206
        %208 = vset.pattern.permute.xlu0 0
        %209 = vperm.xlu0 %208, %v160
        %v210 = vpop.permute.xlu0 %209
        %vm211 = vcmp.eq.s32.totalorder %v162, %v165
        %vm212 = vcmp.eq.s32.totalorder %v162, %v168
        %vm213 = vcmp.eq.s32.totalorder %v162, %v171
        %vm214 = vcmp.eq.s32.totalorder %v162, %v174
        %vm215 = vcmp.eq.s32.totalorder %v162, %v177
        %vm216 = vcmp.eq.s32.totalorder %v162, %v180
        %vm217 = vcmp.eq.s32.totalorder %v162, %v183
        %vm218 = vcmp.eq.s32.totalorder %v162, %v186
        %vm219 = vcmp.eq.s32.totalorder %v162, %v189
        %vm220 = vcmp.eq.s32.totalorder %v162, %v192
        %vm221 = vcmp.eq.s32.totalorder %v162, %v195
        %vm222 = vcmp.eq.s32.totalorder %v162, %v198
        %vm223 = vcmp.eq.s32.totalorder %v162, %v201
        %vm224 = vcmp.eq.s32.totalorder %v162, %v204
        %vm225 = vcmp.eq.s32.totalorder %v162, %v207
        %vm226 = vcmp.eq.s32.totalorder %v162, %v210
        %vm227 = vcmp.ne.s32.totalorder %v145, 0
        %vm228 = vcmp.ne.s32.totalorder %v146, 0
        %vm229 = vcmp.ne.s32.totalorder %v147, 0
        %vm230 = vcmp.ne.s32.totalorder %v148, 0
        %vm231 = vcmp.ne.s32.totalorder %v149, 0
        %vm232 = vcmp.ne.s32.totalorder %v150, 0
        %vm233 = vcmp.ne.s32.totalorder %v151, 0
        %vm234 = vcmp.ne.s32.totalorder %v152, 0
        %vm235 = vcmp.ne.s32.totalorder %v153, 0
        %vm236 = vcmp.ne.s32.totalorder %v154, 0
        %vm237 = vcmp.ne.s32.totalorder %v155, 0
        %vm238 = vcmp.ne.s32.totalorder %v156, 0
        %vm239 = vcmp.ne.s32.totalorder %v157, 0
        %vm240 = vcmp.ne.s32.totalorder %v158, 0
        %vm241 = vcmp.ne.s32.totalorder %v159, 0
        %vm242 = vcmp.ne.s32.totalorder %v160, 0
        %v243 = vsel %vm227, 1, 0
        %v244 = vsel %vm228, 1, 0
        %v245 = vsel %vm229, 1, 0
        %v246 = vsel %vm230, 1, 0
        %v247 = vsel %vm231, 1, 0
        %v248 = vsel %vm232, 1, 0
        %v249 = vsel %vm233, 1, 0
        %v250 = vsel %vm234, 1, 0
        %v251 = vsel %vm235, 1, 0
        %v252 = vsel %vm236, 1, 0
        %v253 = vsel %vm237, 1, 0
        %v254 = vsel %vm238, 1, 0
        %v255 = vsel %vm239, 1, 0
        %v256 = vsel %vm240, 1, 0
        %v257 = vsel %vm241, 1, 0
        %v258 = vsel %vm242, 1, 0
        %259 = vset.pattern.permute.xlu0 0
        %260 = vperm.xlu0 %259, %v243
        %v261 = vpop.permute.xlu0 %260
        %262 = vset.pattern.permute.xlu0 0
        %263 = vperm.xlu0 %262, %v244
        %v264 = vpop.permute.xlu0 %263
        %265 = vset.pattern.permute.xlu0 0
        %266 = vperm.xlu0 %265, %v245
        %v267 = vpop.permute.xlu0 %266
        %268 = vset.pattern.permute.xlu0 0
        %269 = vperm.xlu0 %268, %v246
        %v270 = vpop.permute.xlu0 %269
        %271 = vset.pattern.permute.xlu0 0
        %272 = vperm.xlu0 %271, %v247
        %v273 = vpop.permute.xlu0 %272
        %274 = vset.pattern.permute.xlu0 0
        %275 = vperm.xlu0 %274, %v248
        %v276 = vpop.permute.xlu0 %275
        %277 = vset.pattern.permute.xlu0 0
        %278 = vperm.xlu0 %277, %v249
        %v279 = vpop.permute.xlu0 %278
        %280 = vset.pattern.permute.xlu0 0
        %281 = vperm.xlu0 %280, %v250
        %v282 = vpop.permute.xlu0 %281
        %283 = vset.pattern.permute.xlu0 0
        %284 = vperm.xlu0 %283, %v251
        %v285 = vpop.permute.xlu0 %284
        %286 = vset.pattern.permute.xlu0 0
        %287 = vperm.xlu0 %286, %v252
        %v288 = vpop.permute.xlu0 %287
        %289 = vset.pattern.permute.xlu0 0
        %290 = vperm.xlu0 %289, %v253
        %v291 = vpop.permute.xlu0 %290
        %292 = vset.pattern.permute.xlu0 0
        %293 = vperm.xlu0 %292, %v254
        %v294 = vpop.permute.xlu0 %293
        %295 = vset.pattern.permute.xlu0 0
        %296 = vperm.xlu0 %295, %v255
        %v297 = vpop.permute.xlu0 %296
        %298 = vset.pattern.permute.xlu0 0
        %299 = vperm.xlu0 %298, %v256
        %v300 = vpop.permute.xlu0 %299
        %301 = vset.pattern.permute.xlu0 0
        %302 = vperm.xlu0 %301, %v257
        %v303 = vpop.permute.xlu0 %302
        %304 = vset.pattern.permute.xlu0 0
        %305 = vperm.xlu0 %304, %v258
        %v306 = vpop.permute.xlu0 %305
        %vm307 = vcmp.eq.s32.totalorder %v261, 1
        %vm308 = vcmp.eq.s32.totalorder %v264, 1
        %vm309 = vcmp.eq.s32.totalorder %v267, 1
        %vm310 = vcmp.eq.s32.totalorder %v270, 1
        %vm311 = vcmp.eq.s32.totalorder %v273, 1
        %vm312 = vcmp.eq.s32.totalorder %v276, 1
        %vm313 = vcmp.eq.s32.totalorder %v279, 1
        %vm314 = vcmp.eq.s32.totalorder %v282, 1
        %vm315 = vcmp.eq.s32.totalorder %v285, 1
        %vm316 = vcmp.eq.s32.totalorder %v288, 1
        %vm317 = vcmp.eq.s32.totalorder %v291, 1
        %vm318 = vcmp.eq.s32.totalorder %v294, 1
        %vm319 = vcmp.eq.s32.totalorder %v297, 1
        %vm320 = vcmp.eq.s32.totalorder %v300, 1
        %vm321 = vcmp.eq.s32.totalorder %v303, 1
        %vm322 = vcmp.eq.s32.totalorder %v306, 1
        %vm323 = vmand %vm211, %vm307
        %vm324 = vmand %vm212, %vm308
        %vm325 = vmand %vm213, %vm309
        %vm326 = vmand %vm214, %vm310
        %vm327 = vmand %vm215, %vm311
        %vm328 = vmand %vm216, %vm312
        %vm329 = vmand %vm217, %vm313
        %vm330 = vmand %vm218, %vm314
        %vm331 = vmand %vm219, %vm315
        %vm332 = vmand %vm220, %vm316
        %vm333 = vmand %vm221, %vm317
        %vm334 = vmand %vm222, %vm318
        %vm335 = vmand %vm223, %vm319
        %vm336 = vmand %vm224, %vm320
        %vm337 = vmand %vm225, %vm321
        %vm338 = vmand %vm226, %vm322
        %v339 = vsel %vm323, 1, 0
        %v340 = vsel %vm324, 1, 0
        %v341 = vsel %vm325, 1, 0
        %v342 = vsel %vm326, 1, 0
        %v343 = vsel %vm327, 1, 0
        %v344 = vsel %vm328, 1, 0
        %v345 = vsel %vm329, 1, 0
        %v346 = vsel %vm330, 1, 0
        %v347 = vsel %vm331, 1, 0
        %v348 = vsel %vm332, 1, 0
        %v349 = vsel %vm333, 1, 0
        %v350 = vsel %vm334, 1, 0
        %v351 = vsel %vm335, 1, 0
        %v352 = vsel %vm336, 1, 0
        %v353 = vsel %vm337, 1, 0
        %v354 = vsel %vm338, 1, 0
        %v355 = vcvt.s32.f32 %v339
        %v356 = vcvt.s32.f32 %v340
        %v357 = vcvt.s32.f32 %v341
        %v358 = vcvt.s32.f32 %v342
        %v359 = vcvt.s32.f32 %v343
        %v360 = vcvt.s32.f32 %v344
        %v361 = vcvt.s32.f32 %v345
        %v362 = vcvt.s32.f32 %v346
        %v363 = vcvt.s32.f32 %v347
        %v364 = vcvt.s32.f32 %v348
        %v365 = vcvt.s32.f32 %v349
        %v366 = vcvt.s32.f32 %v350
        %v367 = vcvt.s32.f32 %v351
        %v368 = vcvt.s32.f32 %v352
        %v369 = vcvt.s32.f32 %v353
        %v370 = vcvt.s32.f32 %v354
        %v371 = vadd.f32 %v355, 0.0
        %v372 = vadd.f32 %v356, 0.0
        %v373 = vadd.f32 %v357, 0.0
        %v374 = vadd.f32 %v358, 0.0
        %v375 = vadd.f32 %v359, 0.0
        %v376 = vadd.f32 %v360, 0.0
        %v377 = vadd.f32 %v361, 0.0
        %v378 = vadd.f32 %v362, 0.0
        %v379 = vadd.f32 %v363, 0.0
        %v380 = vadd.f32 %v364, 0.0
        %v381 = vadd.f32 %v365, 0.0
        %v382 = vadd.f32 %v366, 0.0
        %v383 = vadd.f32 %v367, 0.0
        %v384 = vadd.f32 %v368, 0.0
        %v385 = vadd.f32 %v369, 0.0
        %v386 = vadd.f32 %v370, 0.0
        %387 = vset.pattern.permute.xlu0 1
        %388 = vperm.xlu0 %387, %v145
        %v389 = vpop.permute.xlu0 %388
        %390 = vset.pattern.permute.xlu0 1
        %391 = vperm.xlu0 %390, %v146
        %v392 = vpop.permute.xlu0 %391
        %393 = vset.pattern.permute.xlu0 1
        %394 = vperm.xlu0 %393, %v147
        %v395 = vpop.permute.xlu0 %394
        %396 = vset.pattern.permute.xlu0 1
        %397 = vperm.xlu0 %396, %v148
        %v398 = vpop.permute.xlu0 %397
        %399 = vset.pattern.permute.xlu0 1
        %400 = vperm.xlu0 %399, %v149
        %v401 = vpop.permute.xlu0 %400
        %402 = vset.pattern.permute.xlu0 1
        %403 = vperm.xlu0 %402, %v150
        %v404 = vpop.permute.xlu0 %403
        %405 = vset.pattern.permute.xlu0 1
        %406 = vperm.xlu0 %405, %v151
        %v407 = vpop.permute.xlu0 %406
        %408 = vset.pattern.permute.xlu0 1
        %409 = vperm.xlu0 %408, %v152
        %v410 = vpop.permute.xlu0 %409
        %411 = vset.pattern.permute.xlu0 1
        %412 = vperm.xlu0 %411, %v153
        %v413 = vpop.permute.xlu0 %412
        %414 = vset.pattern.permute.xlu0 1
        %415 = vperm.xlu0 %414, %v154
        %v416 = vpop.permute.xlu0 %415
        %417 = vset.pattern.permute.xlu0 1
        %418 = vperm.xlu0 %417, %v155
        %v419 = vpop.permute.xlu0 %418
        %420 = vset.pattern.permute.xlu0 1
        %421 = vperm.xlu0 %420, %v156
        %v422 = vpop.permute.xlu0 %421
        %423 = vset.pattern.permute.xlu0 1
        %424 = vperm.xlu0 %423, %v157
        %v425 = vpop.permute.xlu0 %424
        %426 = vset.pattern.permute.xlu0 1
        %427 = vperm.xlu0 %426, %v158
        %v428 = vpop.permute.xlu0 %427
        %429 = vset.pattern.permute.xlu0 1
        %430 = vperm.xlu0 %429, %v159
        %v431 = vpop.permute.xlu0 %430
        %432 = vset.pattern.permute.xlu0 1
        %433 = vperm.xlu0 %432, %v160
        %v434 = vpop.permute.xlu0 %433
        %vm435 = vcmp.eq.s32.totalorder %v162, %v389
        %vm436 = vcmp.eq.s32.totalorder %v162, %v392
        %vm437 = vcmp.eq.s32.totalorder %v162, %v395
        %vm438 = vcmp.eq.s32.totalorder %v162, %v398
        %vm439 = vcmp.eq.s32.totalorder %v162, %v401
        %vm440 = vcmp.eq.s32.totalorder %v162, %v404
        %vm441 = vcmp.eq.s32.totalorder %v162, %v407
        %vm442 = vcmp.eq.s32.totalorder %v162, %v410
        %vm443 = vcmp.eq.s32.totalorder %v162, %v413
        %vm444 = vcmp.eq.s32.totalorder %v162, %v416
        %vm445 = vcmp.eq.s32.totalorder %v162, %v419
        %vm446 = vcmp.eq.s32.totalorder %v162, %v422
        %vm447 = vcmp.eq.s32.totalorder %v162, %v425
        %vm448 = vcmp.eq.s32.totalorder %v162, %v428
        %vm449 = vcmp.eq.s32.totalorder %v162, %v431
        %vm450 = vcmp.eq.s32.totalorder %v162, %v434
        %451 = vset.pattern.permute.xlu0 1
        %452 = vperm.xlu0 %451, %v243
        %v453 = vpop.permute.xlu0 %452
        %454 = vset.pattern.permute.xlu0 1
        %455 = vperm.xlu0 %454, %v244
        %v456 = vpop.permute.xlu0 %455
        %457 = vset.pattern.permute.xlu0 1
        %458 = vperm.xlu0 %457, %v245
        %v459 = vpop.permute.xlu0 %458
        %460 = vset.pattern.permute.xlu0 1
        %461 = vperm.xlu0 %460, %v246
        %v462 = vpop.permute.xlu0 %461
        %463 = vset.pattern.permute.xlu0 1
        %464 = vperm.xlu0 %463, %v247
        %v465 = vpop.permute.xlu0 %464
        %466 = vset.pattern.permute.xlu0 1
        %467 = vperm.xlu0 %466, %v248
        %v468 = vpop.permute.xlu0 %467
        %469 = vset.pattern.permute.xlu0 1
        %470 = vperm.xlu0 %469, %v249
        %v471 = vpop.permute.xlu0 %470
        %472 = vset.pattern.permute.xlu0 1
        %473 = vperm.xlu0 %472, %v250
        %v474 = vpop.permute.xlu0 %473
        %475 = vset.pattern.permute.xlu0 1
        %476 = vperm.xlu0 %475, %v251
        %v477 = vpop.permute.xlu0 %476
        %478 = vset.pattern.permute.xlu0 1
        %479 = vperm.xlu0 %478, %v252
        %v480 = vpop.permute.xlu0 %479
        %481 = vset.pattern.permute.xlu0 1
        %482 = vperm.xlu0 %481, %v253
        %v483 = vpop.permute.xlu0 %482
        %484 = vset.pattern.permute.xlu0 1
        %485 = vperm.xlu0 %484, %v254
        %v486 = vpop.permute.xlu0 %485
        %487 = vset.pattern.permute.xlu0 1
        %488 = vperm.xlu0 %487, %v255
        %v489 = vpop.permute.xlu0 %488
        %490 = vset.pattern.permute.xlu0 1
        %491 = vperm.xlu0 %490, %v256
        %v492 = vpop.permute.xlu0 %491
        %493 = vset.pattern.permute.xlu0 1
        %494 = vperm.xlu0 %493, %v257
        %v495 = vpop.permute.xlu0 %494
        %496 = vset.pattern.permute.xlu0 1
        %497 = vperm.xlu0 %496, %v258
        %v498 = vpop.permute.xlu0 %497
        %vm499 = vcmp.eq.s32.totalorder %v453, 1
        %vm500 = vcmp.eq.s32.totalorder %v456, 1
        %vm501 = vcmp.eq.s32.totalorder %v459, 1
        %vm502 = vcmp.eq.s32.totalorder %v462, 1
        %vm503 = vcmp.eq.s32.totalorder %v465, 1
        %vm504 = vcmp.eq.s32.totalorder %v468, 1
        %vm505 = vcmp.eq.s32.totalorder %v471, 1
        %vm506 = vcmp.eq.s32.totalorder %v474, 1
        %vm507 = vcmp.eq.s32.totalorder %v477, 1
        %vm508 = vcmp.eq.s32.totalorder %v480, 1
        %vm509 = vcmp.eq.s32.totalorder %v483, 1
        %vm510 = vcmp.eq.s32.totalorder %v486, 1
        %vm511 = vcmp.eq.s32.totalorder %v489, 1
        %vm512 = vcmp.eq.s32.totalorder %v492, 1
        %vm513 = vcmp.eq.s32.totalorder %v495, 1
        %vm514 = vcmp.eq.s32.totalorder %v498, 1
        %vm515 = vmand %vm435, %vm499
        %vm516 = vmand %vm436, %vm500
        %vm517 = vmand %vm437, %vm501
        %vm518 = vmand %vm438, %vm502
        %vm519 = vmand %vm439, %vm503
        %vm520 = vmand %vm440, %vm504
        %vm521 = vmand %vm441, %vm505
        %vm522 = vmand %vm442, %vm506
        %vm523 = vmand %vm443, %vm507
        %vm524 = vmand %vm444, %vm508
        %vm525 = vmand %vm445, %vm509
        %vm526 = vmand %vm446, %vm510
        %vm527 = vmand %vm447, %vm511
        %vm528 = vmand %vm448, %vm512
        %vm529 = vmand %vm449, %vm513
        %vm530 = vmand %vm450, %vm514
        %v531 = vsel %vm515, 1, 0
        %v532 = vsel %vm516, 1, 0
        %v533 = vsel %vm517, 1, 0
        %v534 = vsel %vm518, 1, 0
        %v535 = vsel %vm519, 1, 0
        %v536 = vsel %vm520, 1, 0
        %v537 = vsel %vm521, 1, 0
        %v538 = vsel %vm522, 1, 0
        %v539 = vsel %vm523, 1, 0
        %v540 = vsel %vm524, 1, 0
        %v541 = vsel %vm525, 1, 0
        %v542 = vsel %vm526, 1, 0
        %v543 = vsel %vm527, 1, 0
        %v544 = vsel %vm528, 1, 0
        %v545 = vsel %vm529, 1, 0
        %v546 = vsel %vm530, 1, 0
        %v547 = vcvt.s32.f32 %v531
        %v548 = vcvt.s32.f32 %v532
        %v549 = vcvt.s32.f32 %v533
        %v550 = vcvt.s32.f32 %v534
        %v551 = vcvt.s32.f32 %v535
        %v552 = vcvt.s32.f32 %v536
        %v553 = vcvt.s32.f32 %v537
        %v554 = vcvt.s32.f32 %v538
        %v555 = vcvt.s32.f32 %v539
        %v556 = vcvt.s32.f32 %v540
        %v557 = vcvt.s32.f32 %v541
        %v558 = vcvt.s32.f32 %v542
        %v559 = vcvt.s32.f32 %v543
        %v560 = vcvt.s32.f32 %v544
        %v561 = vcvt.s32.f32 %v545
        %v562 = vcvt.s32.f32 %v546
        %v563 = vadd.f32 %v371, %v547
        %v564 = vadd.f32 %v372, %v548
        %v565 = vadd.f32 %v373, %v549
        %v566 = vadd.f32 %v374, %v550
        %v567 = vadd.f32 %v375, %v551
        %v568 = vadd.f32 %v376, %v552
        %v569 = vadd.f32 %v377, %v553
        %v570 = vadd.f32 %v378, %v554
        %v571 = vadd.f32 %v379, %v555
        %v572 = vadd.f32 %v380, %v556
        %v573 = vadd.f32 %v381, %v557
        %v574 = vadd.f32 %v382, %v558
        %v575 = vadd.f32 %v383, %v559
        %v576 = vadd.f32 %v384, %v560
        %v577 = vadd.f32 %v385, %v561
        %v578 = vadd.f32 %v386, %v562
        %579 = vset.pattern.permute.xlu0 2
        %580 = vperm.xlu0 %579, %v145
        %v581 = vpop.permute.xlu0 %580
        %582 = vset.pattern.permute.xlu0 2
        %583 = vperm.xlu0 %582, %v146
        %v584 = vpop.permute.xlu0 %583
        %585 = vset.pattern.permute.xlu0 2
        %586 = vperm.xlu0 %585, %v147
        %v587 = vpop.permute.xlu0 %586
        %588 = vset.pattern.permute.xlu0 2
        %589 = vperm.xlu0 %588, %v148
        %v590 = vpop.permute.xlu0 %589
        %591 = vset.pattern.permute.xlu0 2
        %592 = vperm.xlu0 %591, %v149
        %v593 = vpop.permute.xlu0 %592
        %594 = vset.pattern.permute.xlu0 2
        %595 = vperm.xlu0 %594, %v150
        %v596 = vpop.permute.xlu0 %595
        %597 = vset.pattern.permute.xlu0 2
        %598 = vperm.xlu0 %597, %v151
        %v599 = vpop.permute.xlu0 %598
        %600 = vset.pattern.permute.xlu0 2
        %601 = vperm.xlu0 %600, %v152
        %v602 = vpop.permute.xlu0 %601
        %603 = vset.pattern.permute.xlu0 2
        %604 = vperm.xlu0 %603, %v153
        %v605 = vpop.permute.xlu0 %604
        %606 = vset.pattern.permute.xlu0 2
        %607 = vperm.xlu0 %606, %v154
        %v608 = vpop.permute.xlu0 %607
        %609 = vset.pattern.permute.xlu0 2
        %610 = vperm.xlu0 %609, %v155
        %v611 = vpop.permute.xlu0 %610
        %612 = vset.pattern.permute.xlu0 2
        %613 = vperm.xlu0 %612, %v156
        %v614 = vpop.permute.xlu0 %613
        %615 = vset.pattern.permute.xlu0 2
        %616 = vperm.xlu0 %615, %v157
        %v617 = vpop.permute.xlu0 %616
        %618 = vset.pattern.permute.xlu0 2
        %619 = vperm.xlu0 %618, %v158
        %v620 = vpop.permute.xlu0 %619
        %621 = vset.pattern.permute.xlu0 2
        %622 = vperm.xlu0 %621, %v159
        %v623 = vpop.permute.xlu0 %622
        %624 = vset.pattern.permute.xlu0 2
        %625 = vperm.xlu0 %624, %v160
        %v626 = vpop.permute.xlu0 %625
        %vm627 = vcmp.eq.s32.totalorder %v162, %v581
        %vm628 = vcmp.eq.s32.totalorder %v162, %v584
        %vm629 = vcmp.eq.s32.totalorder %v162, %v587
        %vm630 = vcmp.eq.s32.totalorder %v162, %v590
        %vm631 = vcmp.eq.s32.totalorder %v162, %v593
        %vm632 = vcmp.eq.s32.totalorder %v162, %v596
        %vm633 = vcmp.eq.s32.totalorder %v162, %v599
        %vm634 = vcmp.eq.s32.totalorder %v162, %v602
        %vm635 = vcmp.eq.s32.totalorder %v162, %v605
        %vm636 = vcmp.eq.s32.totalorder %v162, %v608
        %vm637 = vcmp.eq.s32.totalorder %v162, %v611
        %vm638 = vcmp.eq.s32.totalorder %v162, %v614
        %vm639 = vcmp.eq.s32.totalorder %v162, %v617
        %vm640 = vcmp.eq.s32.totalorder %v162, %v620
        %vm641 = vcmp.eq.s32.totalorder %v162, %v623
        %vm642 = vcmp.eq.s32.totalorder %v162, %v626
        %643 = vset.pattern.permute.xlu0 2
        %644 = vperm.xlu0 %643, %v243
        %v645 = vpop.permute.xlu0 %644
        %646 = vset.pattern.permute.xlu0 2
        %647 = vperm.xlu0 %646, %v244
        %v648 = vpop.permute.xlu0 %647
        %649 = vset.pattern.permute.xlu0 2
        %650 = vperm.xlu0 %649, %v245
        %v651 = vpop.permute.xlu0 %650
        %652 = vset.pattern.permute.xlu0 2
        %653 = vperm.xlu0 %652, %v246
        %v654 = vpop.permute.xlu0 %653
        %655 = vset.pattern.permute.xlu0 2
        %656 = vperm.xlu0 %655, %v247
        %v657 = vpop.permute.xlu0 %656
        %658 = vset.pattern.permute.xlu0 2
        %659 = vperm.xlu0 %658, %v248
        %v660 = vpop.permute.xlu0 %659
        %661 = vset.pattern.permute.xlu0 2
        %662 = vperm.xlu0 %661, %v249
        %v663 = vpop.permute.xlu0 %662
        %664 = vset.pattern.permute.xlu0 2
        %665 = vperm.xlu0 %664, %v250
        %v666 = vpop.permute.xlu0 %665
        %667 = vset.pattern.permute.xlu0 2
        %668 = vperm.xlu0 %667, %v251
        %v669 = vpop.permute.xlu0 %668
        %670 = vset.pattern.permute.xlu0 2
        %671 = vperm.xlu0 %670, %v252
        %v672 = vpop.permute.xlu0 %671
        %673 = vset.pattern.permute.xlu0 2
        %674 = vperm.xlu0 %673, %v253
        %v675 = vpop.permute.xlu0 %674
        %676 = vset.pattern.permute.xlu0 2
        %677 = vperm.xlu0 %676, %v254
        %v678 = vpop.permute.xlu0 %677
        %679 = vset.pattern.permute.xlu0 2
        %680 = vperm.xlu0 %679, %v255
        %v681 = vpop.permute.xlu0 %680
        %682 = vset.pattern.permute.xlu0 2
        %683 = vperm.xlu0 %682, %v256
        %v684 = vpop.permute.xlu0 %683
        %685 = vset.pattern.permute.xlu0 2
        %686 = vperm.xlu0 %685, %v257
        %v687 = vpop.permute.xlu0 %686
        %688 = vset.pattern.permute.xlu0 2
        %689 = vperm.xlu0 %688, %v258
        %v690 = vpop.permute.xlu0 %689
        %vm691 = vcmp.eq.s32.totalorder %v645, 1
        %vm692 = vcmp.eq.s32.totalorder %v648, 1
        %vm693 = vcmp.eq.s32.totalorder %v651, 1
        %vm694 = vcmp.eq.s32.totalorder %v654, 1
        %vm695 = vcmp.eq.s32.totalorder %v657, 1
        %vm696 = vcmp.eq.s32.totalorder %v660, 1
        %vm697 = vcmp.eq.s32.totalorder %v663, 1
        %vm698 = vcmp.eq.s32.totalorder %v666, 1
        %vm699 = vcmp.eq.s32.totalorder %v669, 1
        %vm700 = vcmp.eq.s32.totalorder %v672, 1
        %vm701 = vcmp.eq.s32.totalorder %v675, 1
        %vm702 = vcmp.eq.s32.totalorder %v678, 1
        %vm703 = vcmp.eq.s32.totalorder %v681, 1
        %vm704 = vcmp.eq.s32.totalorder %v684, 1
        %vm705 = vcmp.eq.s32.totalorder %v687, 1
        %vm706 = vcmp.eq.s32.totalorder %v690, 1
        %vm707 = vmand %vm627, %vm691
        %vm708 = vmand %vm628, %vm692
        %vm709 = vmand %vm629, %vm693
        %vm710 = vmand %vm630, %vm694
        %vm711 = vmand %vm631, %vm695
        %vm712 = vmand %vm632, %vm696
        %vm713 = vmand %vm633, %vm697
        %vm714 = vmand %vm634, %vm698
        %vm715 = vmand %vm635, %vm699
        %vm716 = vmand %vm636, %vm700
        %vm717 = vmand %vm637, %vm701
        %vm718 = vmand %vm638, %vm702
        %vm719 = vmand %vm639, %vm703
        %vm720 = vmand %vm640, %vm704
        %vm721 = vmand %vm641, %vm705
        %vm722 = vmand %vm642, %vm706
        %v723 = vsel %vm707, 1, 0
        %v724 = vsel %vm708, 1, 0
        %v725 = vsel %vm709, 1, 0
        %v726 = vsel %vm710, 1, 0
        %v727 = vsel %vm711, 1, 0
        %v728 = vsel %vm712, 1, 0
        %v729 = vsel %vm713, 1, 0
        %v730 = vsel %vm714, 1, 0
        %v731 = vsel %vm715, 1, 0
        %v732 = vsel %vm716, 1, 0
        %v733 = vsel %vm717, 1, 0
        %v734 = vsel %vm718, 1, 0
        %v735 = vsel %vm719, 1, 0
        %v736 = vsel %vm720, 1, 0
        %v737 = vsel %vm721, 1, 0
        %v738 = vsel %vm722, 1, 0
        %v739 = vcvt.s32.f32 %v723
        %v740 = vcvt.s32.f32 %v724
        %v741 = vcvt.s32.f32 %v725
        %v742 = vcvt.s32.f32 %v726
        %v743 = vcvt.s32.f32 %v727
        %v744 = vcvt.s32.f32 %v728
        %v745 = vcvt.s32.f32 %v729
        %v746 = vcvt.s32.f32 %v730
        %v747 = vcvt.s32.f32 %v731
        %v748 = vcvt.s32.f32 %v732
        %v749 = vcvt.s32.f32 %v733
        %v750 = vcvt.s32.f32 %v734
        %v751 = vcvt.s32.f32 %v735
        %v752 = vcvt.s32.f32 %v736
        %v753 = vcvt.s32.f32 %v737
        %v754 = vcvt.s32.f32 %v738
        %v755 = vadd.f32 %v563, %v739
        %v756 = vadd.f32 %v564, %v740
        %v757 = vadd.f32 %v565, %v741
        %v758 = vadd.f32 %v566, %v742
        %v759 = vadd.f32 %v567, %v743
        %v760 = vadd.f32 %v568, %v744
        %v761 = vadd.f32 %v569, %v745
        %v762 = vadd.f32 %v570, %v746
        %v763 = vadd.f32 %v571, %v747
        %v764 = vadd.f32 %v572, %v748
        %v765 = vadd.f32 %v573, %v749
        %v766 = vadd.f32 %v574, %v750
        %v767 = vadd.f32 %v575, %v751
        %v768 = vadd.f32 %v576, %v752
        %v769 = vadd.f32 %v577, %v753
        %v770 = vadd.f32 %v578, %v754
        %771 = vset.pattern.permute.xlu0 3
        %772 = vperm.xlu0 %771, %v145
        %v773 = vpop.permute.xlu0 %772
        %774 = vset.pattern.permute.xlu0 3
        %775 = vperm.xlu0 %774, %v146
        %v776 = vpop.permute.xlu0 %775
        %777 = vset.pattern.permute.xlu0 3
        %778 = vperm.xlu0 %777, %v147
        %v779 = vpop.permute.xlu0 %778
        %780 = vset.pattern.permute.xlu0 3
        %781 = vperm.xlu0 %780, %v148
        %v782 = vpop.permute.xlu0 %781
        %783 = vset.pattern.permute.xlu0 3
        %784 = vperm.xlu0 %783, %v149
        %v785 = vpop.permute.xlu0 %784
        %786 = vset.pattern.permute.xlu0 3
        %787 = vperm.xlu0 %786, %v150
        %v788 = vpop.permute.xlu0 %787
        %789 = vset.pattern.permute.xlu0 3
        %790 = vperm.xlu0 %789, %v151
        %v791 = vpop.permute.xlu0 %790
        %792 = vset.pattern.permute.xlu0 3
        %793 = vperm.xlu0 %792, %v152
        %v794 = vpop.permute.xlu0 %793
        %795 = vset.pattern.permute.xlu0 3
        %796 = vperm.xlu0 %795, %v153
        %v797 = vpop.permute.xlu0 %796
        %798 = vset.pattern.permute.xlu0 3
        %799 = vperm.xlu0 %798, %v154
        %v800 = vpop.permute.xlu0 %799
        %801 = vset.pattern.permute.xlu0 3
        %802 = vperm.xlu0 %801, %v155
        %v803 = vpop.permute.xlu0 %802
        %804 = vset.pattern.permute.xlu0 3
        %805 = vperm.xlu0 %804, %v156
        %v806 = vpop.permute.xlu0 %805
        %807 = vset.pattern.permute.xlu0 3
        %808 = vperm.xlu0 %807, %v157
        %v809 = vpop.permute.xlu0 %808
        %810 = vset.pattern.permute.xlu0 3
        %811 = vperm.xlu0 %810, %v158
        %v812 = vpop.permute.xlu0 %811
        %813 = vset.pattern.permute.xlu0 3
        %814 = vperm.xlu0 %813, %v159
        %v815 = vpop.permute.xlu0 %814
        %816 = vset.pattern.permute.xlu0 3
        %817 = vperm.xlu0 %816, %v160
        %v818 = vpop.permute.xlu0 %817
        %vm819 = vcmp.eq.s32.totalorder %v162, %v773
        %vm820 = vcmp.eq.s32.totalorder %v162, %v776
        %vm821 = vcmp.eq.s32.totalorder %v162, %v779
        %vm822 = vcmp.eq.s32.totalorder %v162, %v782
        %vm823 = vcmp.eq.s32.totalorder %v162, %v785
        %vm824 = vcmp.eq.s32.totalorder %v162, %v788
        %vm825 = vcmp.eq.s32.totalorder %v162, %v791
        %vm826 = vcmp.eq.s32.totalorder %v162, %v794
        %vm827 = vcmp.eq.s32.totalorder %v162, %v797
        %vm828 = vcmp.eq.s32.totalorder %v162, %v800
        %vm829 = vcmp.eq.s32.totalorder %v162, %v803
        %vm830 = vcmp.eq.s32.totalorder %v162, %v806
        %vm831 = vcmp.eq.s32.totalorder %v162, %v809
        %vm832 = vcmp.eq.s32.totalorder %v162, %v812
        %vm833 = vcmp.eq.s32.totalorder %v162, %v815
        %vm834 = vcmp.eq.s32.totalorder %v162, %v818
        %835 = vset.pattern.permute.xlu0 3
        %836 = vperm.xlu0 %835, %v243
        %v837 = vpop.permute.xlu0 %836
        %838 = vset.pattern.permute.xlu0 3
        %839 = vperm.xlu0 %838, %v244
        %v840 = vpop.permute.xlu0 %839
        %841 = vset.pattern.permute.xlu0 3
        %842 = vperm.xlu0 %841, %v245
        %v843 = vpop.permute.xlu0 %842
        %844 = vset.pattern.permute.xlu0 3
        %845 = vperm.xlu0 %844, %v246
        %v846 = vpop.permute.xlu0 %845
        %847 = vset.pattern.permute.xlu0 3
        %848 = vperm.xlu0 %847, %v247
        %v849 = vpop.permute.xlu0 %848
        %850 = vset.pattern.permute.xlu0 3
        %851 = vperm.xlu0 %850, %v248
        %v852 = vpop.permute.xlu0 %851
        %853 = vset.pattern.permute.xlu0 3
        %854 = vperm.xlu0 %853, %v249
        %v855 = vpop.permute.xlu0 %854
        %856 = vset.pattern.permute.xlu0 3
        %857 = vperm.xlu0 %856, %v250
        %v858 = vpop.permute.xlu0 %857
        %859 = vset.pattern.permute.xlu0 3
        %860 = vperm.xlu0 %859, %v251
        %v861 = vpop.permute.xlu0 %860
        %862 = vset.pattern.permute.xlu0 3
        %863 = vperm.xlu0 %862, %v252
        %v864 = vpop.permute.xlu0 %863
        %865 = vset.pattern.permute.xlu0 3
        %866 = vperm.xlu0 %865, %v253
        %v867 = vpop.permute.xlu0 %866
        %868 = vset.pattern.permute.xlu0 3
        %869 = vperm.xlu0 %868, %v254
        %v870 = vpop.permute.xlu0 %869
        %871 = vset.pattern.permute.xlu0 3
        %872 = vperm.xlu0 %871, %v255
        %v873 = vpop.permute.xlu0 %872
        %874 = vset.pattern.permute.xlu0 3
        %875 = vperm.xlu0 %874, %v256
        %v876 = vpop.permute.xlu0 %875
        %877 = vset.pattern.permute.xlu0 3
        %878 = vperm.xlu0 %877, %v257
        %v879 = vpop.permute.xlu0 %878
        %880 = vset.pattern.permute.xlu0 3
        %881 = vperm.xlu0 %880, %v258
        %v882 = vpop.permute.xlu0 %881
        %vm883 = vcmp.eq.s32.totalorder %v837, 1
        %vm884 = vcmp.eq.s32.totalorder %v840, 1
        %vm885 = vcmp.eq.s32.totalorder %v843, 1
        %vm886 = vcmp.eq.s32.totalorder %v846, 1
        %vm887 = vcmp.eq.s32.totalorder %v849, 1
        %vm888 = vcmp.eq.s32.totalorder %v852, 1
        %vm889 = vcmp.eq.s32.totalorder %v855, 1
        %vm890 = vcmp.eq.s32.totalorder %v858, 1
        %vm891 = vcmp.eq.s32.totalorder %v861, 1
        %vm892 = vcmp.eq.s32.totalorder %v864, 1
        %vm893 = vcmp.eq.s32.totalorder %v867, 1
        %vm894 = vcmp.eq.s32.totalorder %v870, 1
        %vm895 = vcmp.eq.s32.totalorder %v873, 1
        %vm896 = vcmp.eq.s32.totalorder %v876, 1
        %vm897 = vcmp.eq.s32.totalorder %v879, 1
        %vm898 = vcmp.eq.s32.totalorder %v882, 1
        %vm899 = vmand %vm819, %vm883
        %vm900 = vmand %vm820, %vm884
        %vm901 = vmand %vm821, %vm885
        %vm902 = vmand %vm822, %vm886
        %vm903 = vmand %vm823, %vm887
        %vm904 = vmand %vm824, %vm888
        %vm905 = vmand %vm825, %vm889
        %vm906 = vmand %vm826, %vm890
        %vm907 = vmand %vm827, %vm891
        %vm908 = vmand %vm828, %vm892
        %vm909 = vmand %vm829, %vm893
        %vm910 = vmand %vm830, %vm894
        %vm911 = vmand %vm831, %vm895
        %vm912 = vmand %vm832, %vm896
        %vm913 = vmand %vm833, %vm897
        %vm914 = vmand %vm834, %vm898
        %v915 = vsel %vm899, 1, 0
        %v916 = vsel %vm900, 1, 0
        %v917 = vsel %vm901, 1, 0
        %v918 = vsel %vm902, 1, 0
        %v919 = vsel %vm903, 1, 0
        %v920 = vsel %vm904, 1, 0
        %v921 = vsel %vm905, 1, 0
        %v922 = vsel %vm906, 1, 0
        %v923 = vsel %vm907, 1, 0
        %v924 = vsel %vm908, 1, 0
        %v925 = vsel %vm909, 1, 0
        %v926 = vsel %vm910, 1, 0
        %v927 = vsel %vm911, 1, 0
        %v928 = vsel %vm912, 1, 0
        %v929 = vsel %vm913, 1, 0
        %v930 = vsel %vm914, 1, 0
        %v931 = vcvt.s32.f32 %v915
        %v932 = vcvt.s32.f32 %v916
        %v933 = vcvt.s32.f32 %v917
        %v934 = vcvt.s32.f32 %v918
        %v935 = vcvt.s32.f32 %v919
        %v936 = vcvt.s32.f32 %v920
        %v937 = vcvt.s32.f32 %v921
        %v938 = vcvt.s32.f32 %v922
        %v939 = vcvt.s32.f32 %v923
        %v940 = vcvt.s32.f32 %v924
        %v941 = vcvt.s32.f32 %v925
        %v942 = vcvt.s32.f32 %v926
        %v943 = vcvt.s32.f32 %v927
        %v944 = vcvt.s32.f32 %v928
        %v945 = vcvt.s32.f32 %v929
        %v946 = vcvt.s32.f32 %v930
        %v947 = vadd.f32 %v755, %v931
        %v948 = vadd.f32 %v756, %v932
        %v949 = vadd.f32 %v757, %v933
        %v950 = vadd.f32 %v758, %v934
        %v951 = vadd.f32 %v759, %v935
        %v952 = vadd.f32 %v760, %v936
        %v953 = vadd.f32 %v761, %v937
        %v954 = vadd.f32 %v762, %v938
        %v955 = vadd.f32 %v763, %v939
        %v956 = vadd.f32 %v764, %v940
        %v957 = vadd.f32 %v765, %v941
        %v958 = vadd.f32 %v766, %v942
        %v959 = vadd.f32 %v767, %v943
        %v960 = vadd.f32 %v768, %v944
        %v961 = vadd.f32 %v769, %v945
        %v962 = vadd.f32 %v770, %v946
        %963 = vset.pattern.permute.xlu0 4
        %964 = vperm.xlu0 %963, %v145
        %v965 = vpop.permute.xlu0 %964
        %966 = vset.pattern.permute.xlu0 4
        %967 = vperm.xlu0 %966, %v146
        %v968 = vpop.permute.xlu0 %967
        %969 = vset.pattern.permute.xlu0 4
        %970 = vperm.xlu0 %969, %v147
        %v971 = vpop.permute.xlu0 %970
        %972 = vset.pattern.permute.xlu0 4
        %973 = vperm.xlu0 %972, %v148
        %v974 = vpop.permute.xlu0 %973
        %975 = vset.pattern.permute.xlu0 4
        %976 = vperm.xlu0 %975, %v149
        %v977 = vpop.permute.xlu0 %976
        %978 = vset.pattern.permute.xlu0 4
        %979 = vperm.xlu0 %978, %v150
        %v980 = vpop.permute.xlu0 %979
        %981 = vset.pattern.permute.xlu0 4
        %982 = vperm.xlu0 %981, %v151
        %v983 = vpop.permute.xlu0 %982
        %984 = vset.pattern.permute.xlu0 4
        %985 = vperm.xlu0 %984, %v152
        %v986 = vpop.permute.xlu0 %985
        %987 = vset.pattern.permute.xlu0 4
        %988 = vperm.xlu0 %987, %v153
        %v989 = vpop.permute.xlu0 %988
        %990 = vset.pattern.permute.xlu0 4
        %991 = vperm.xlu0 %990, %v154
        %v992 = vpop.permute.xlu0 %991
        %993 = vset.pattern.permute.xlu0 4
        %994 = vperm.xlu0 %993, %v155
        %v995 = vpop.permute.xlu0 %994
        %996 = vset.pattern.permute.xlu0 4
        %997 = vperm.xlu0 %996, %v156
        %v998 = vpop.permute.xlu0 %997
        %999 = vset.pattern.permute.xlu0 4
        %1000 = vperm.xlu0 %999, %v157
        %v1001 = vpop.permute.xlu0 %1000
        %1002 = vset.pattern.permute.xlu0 4
        %1003 = vperm.xlu0 %1002, %v158
        %v1004 = vpop.permute.xlu0 %1003
        %1005 = vset.pattern.permute.xlu0 4
        %1006 = vperm.xlu0 %1005, %v159
        %v1007 = vpop.permute.xlu0 %1006
        %1008 = vset.pattern.permute.xlu0 4
        %1009 = vperm.xlu0 %1008, %v160
        %v1010 = vpop.permute.xlu0 %1009
        %vm1011 = vcmp.eq.s32.totalorder %v162, %v965
        %vm1012 = vcmp.eq.s32.totalorder %v162, %v968
        %vm1013 = vcmp.eq.s32.totalorder %v162, %v971
        %vm1014 = vcmp.eq.s32.totalorder %v162, %v974
        %vm1015 = vcmp.eq.s32.totalorder %v162, %v977
        %vm1016 = vcmp.eq.s32.totalorder %v162, %v980
        %vm1017 = vcmp.eq.s32.totalorder %v162, %v983
        %vm1018 = vcmp.eq.s32.totalorder %v162, %v986
        %vm1019 = vcmp.eq.s32.totalorder %v162, %v989
        %vm1020 = vcmp.eq.s32.totalorder %v162, %v992
        %vm1021 = vcmp.eq.s32.totalorder %v162, %v995
        %vm1022 = vcmp.eq.s32.totalorder %v162, %v998
        %vm1023 = vcmp.eq.s32.totalorder %v162, %v1001
        %vm1024 = vcmp.eq.s32.totalorder %v162, %v1004
        %vm1025 = vcmp.eq.s32.totalorder %v162, %v1007
        %vm1026 = vcmp.eq.s32.totalorder %v162, %v1010
        %1027 = vset.pattern.permute.xlu0 4
        %1028 = vperm.xlu0 %1027, %v243
        %v1029 = vpop.permute.xlu0 %1028
        %1030 = vset.pattern.permute.xlu0 4
        %1031 = vperm.xlu0 %1030, %v244
        %v1032 = vpop.permute.xlu0 %1031
        %1033 = vset.pattern.permute.xlu0 4
        %1034 = vperm.xlu0 %1033, %v245
        %v1035 = vpop.permute.xlu0 %1034
        %1036 = vset.pattern.permute.xlu0 4
        %1037 = vperm.xlu0 %1036, %v246
        %v1038 = vpop.permute.xlu0 %1037
        %1039 = vset.pattern.permute.xlu0 4
        %1040 = vperm.xlu0 %1039, %v247
        %v1041 = vpop.permute.xlu0 %1040
        %1042 = vset.pattern.permute.xlu0 4
        %1043 = vperm.xlu0 %1042, %v248
        %v1044 = vpop.permute.xlu0 %1043
        %1045 = vset.pattern.permute.xlu0 4
        %1046 = vperm.xlu0 %1045, %v249
        %v1047 = vpop.permute.xlu0 %1046
        %1048 = vset.pattern.permute.xlu0 4
        %1049 = vperm.xlu0 %1048, %v250
        %v1050 = vpop.permute.xlu0 %1049
        %1051 = vset.pattern.permute.xlu0 4
        %1052 = vperm.xlu0 %1051, %v251
        %v1053 = vpop.permute.xlu0 %1052
        %1054 = vset.pattern.permute.xlu0 4
        %1055 = vperm.xlu0 %1054, %v252
        %v1056 = vpop.permute.xlu0 %1055
        %1057 = vset.pattern.permute.xlu0 4
        %1058 = vperm.xlu0 %1057, %v253
        %v1059 = vpop.permute.xlu0 %1058
        %1060 = vset.pattern.permute.xlu0 4
        %1061 = vperm.xlu0 %1060, %v254
        %v1062 = vpop.permute.xlu0 %1061
        %1063 = vset.pattern.permute.xlu0 4
        %1064 = vperm.xlu0 %1063, %v255
        %v1065 = vpop.permute.xlu0 %1064
        %1066 = vset.pattern.permute.xlu0 4
        %1067 = vperm.xlu0 %1066, %v256
        %v1068 = vpop.permute.xlu0 %1067
        %1069 = vset.pattern.permute.xlu0 4
        %1070 = vperm.xlu0 %1069, %v257
        %v1071 = vpop.permute.xlu0 %1070
        %1072 = vset.pattern.permute.xlu0 4
        %1073 = vperm.xlu0 %1072, %v258
        %v1074 = vpop.permute.xlu0 %1073
        %vm1075 = vcmp.eq.s32.totalorder %v1029, 1
        %vm1076 = vcmp.eq.s32.totalorder %v1032, 1
        %vm1077 = vcmp.eq.s32.totalorder %v1035, 1
        %vm1078 = vcmp.eq.s32.totalorder %v1038, 1
        %vm1079 = vcmp.eq.s32.totalorder %v1041, 1
        %vm1080 = vcmp.eq.s32.totalorder %v1044, 1
        %vm1081 = vcmp.eq.s32.totalorder %v1047, 1
        %vm1082 = vcmp.eq.s32.totalorder %v1050, 1
        %vm1083 = vcmp.eq.s32.totalorder %v1053, 1
        %vm1084 = vcmp.eq.s32.totalorder %v1056, 1
        %vm1085 = vcmp.eq.s32.totalorder %v1059, 1
        %vm1086 = vcmp.eq.s32.totalorder %v1062, 1
        %vm1087 = vcmp.eq.s32.totalorder %v1065, 1
        %vm1088 = vcmp.eq.s32.totalorder %v1068, 1
        %vm1089 = vcmp.eq.s32.totalorder %v1071, 1
        %vm1090 = vcmp.eq.s32.totalorder %v1074, 1
        %vm1091 = vmand %vm1011, %vm1075
        %vm1092 = vmand %vm1012, %vm1076
        %vm1093 = vmand %vm1013, %vm1077
        %vm1094 = vmand %vm1014, %vm1078
        %vm1095 = vmand %vm1015, %vm1079
        %vm1096 = vmand %vm1016, %vm1080
        %vm1097 = vmand %vm1017, %vm1081
        %vm1098 = vmand %vm1018, %vm1082
        %vm1099 = vmand %vm1019, %vm1083
        %vm1100 = vmand %vm1020, %vm1084
        %vm1101 = vmand %vm1021, %vm1085
        %vm1102 = vmand %vm1022, %vm1086
        %vm1103 = vmand %vm1023, %vm1087
        %vm1104 = vmand %vm1024, %vm1088
        %vm1105 = vmand %vm1025, %vm1089
        %vm1106 = vmand %vm1026, %vm1090
        %v1107 = vsel %vm1091, 1, 0
        %v1108 = vsel %vm1092, 1, 0
        %v1109 = vsel %vm1093, 1, 0
        %v1110 = vsel %vm1094, 1, 0
        %v1111 = vsel %vm1095, 1, 0
        %v1112 = vsel %vm1096, 1, 0
        %v1113 = vsel %vm1097, 1, 0
        %v1114 = vsel %vm1098, 1, 0
        %v1115 = vsel %vm1099, 1, 0
        %v1116 = vsel %vm1100, 1, 0
        %v1117 = vsel %vm1101, 1, 0
        %v1118 = vsel %vm1102, 1, 0
        %v1119 = vsel %vm1103, 1, 0
        %v1120 = vsel %vm1104, 1, 0
        %v1121 = vsel %vm1105, 1, 0
        %v1122 = vsel %vm1106, 1, 0
        %v1123 = vcvt.s32.f32 %v1107
        %v1124 = vcvt.s32.f32 %v1108
        %v1125 = vcvt.s32.f32 %v1109
        %v1126 = vcvt.s32.f32 %v1110
        %v1127 = vcvt.s32.f32 %v1111
        %v1128 = vcvt.s32.f32 %v1112
        %v1129 = vcvt.s32.f32 %v1113
        %v1130 = vcvt.s32.f32 %v1114
        %v1131 = vcvt.s32.f32 %v1115
        %v1132 = vcvt.s32.f32 %v1116
        %v1133 = vcvt.s32.f32 %v1117
        %v1134 = vcvt.s32.f32 %v1118
        %v1135 = vcvt.s32.f32 %v1119
        %v1136 = vcvt.s32.f32 %v1120
        %v1137 = vcvt.s32.f32 %v1121
        %v1138 = vcvt.s32.f32 %v1122
        %v1139 = vadd.f32 %v947, %v1123
        %v1140 = vadd.f32 %v948, %v1124
        %v1141 = vadd.f32 %v949, %v1125
        %v1142 = vadd.f32 %v950, %v1126
        %v1143 = vadd.f32 %v951, %v1127
        %v1144 = vadd.f32 %v952, %v1128
        %v1145 = vadd.f32 %v953, %v1129
        %v1146 = vadd.f32 %v954, %v1130
        %v1147 = vadd.f32 %v955, %v1131
        %v1148 = vadd.f32 %v956, %v1132
        %v1149 = vadd.f32 %v957, %v1133
        %v1150 = vadd.f32 %v958, %v1134
        %v1151 = vadd.f32 %v959, %v1135
        %v1152 = vadd.f32 %v960, %v1136
        %v1153 = vadd.f32 %v961, %v1137
        %v1154 = vadd.f32 %v962, %v1138
        %1155 = vset.pattern.permute.xlu0 5
        %1156 = vperm.xlu0 %1155, %v145
        %v1157 = vpop.permute.xlu0 %1156
        %1158 = vset.pattern.permute.xlu0 5
        %1159 = vperm.xlu0 %1158, %v146
        %v1160 = vpop.permute.xlu0 %1159
        %1161 = vset.pattern.permute.xlu0 5
        %1162 = vperm.xlu0 %1161, %v147
        %v1163 = vpop.permute.xlu0 %1162
        %1164 = vset.pattern.permute.xlu0 5
        %1165 = vperm.xlu0 %1164, %v148
        %v1166 = vpop.permute.xlu0 %1165
        %1167 = vset.pattern.permute.xlu0 5
        %1168 = vperm.xlu0 %1167, %v149
        %v1169 = vpop.permute.xlu0 %1168
        %1170 = vset.pattern.permute.xlu0 5
        %1171 = vperm.xlu0 %1170, %v150
        %v1172 = vpop.permute.xlu0 %1171
        %1173 = vset.pattern.permute.xlu0 5
        %1174 = vperm.xlu0 %1173, %v151
        %v1175 = vpop.permute.xlu0 %1174
        %1176 = vset.pattern.permute.xlu0 5
        %1177 = vperm.xlu0 %1176, %v152
        %v1178 = vpop.permute.xlu0 %1177
        %1179 = vset.pattern.permute.xlu0 5
        %1180 = vperm.xlu0 %1179, %v153
        %v1181 = vpop.permute.xlu0 %1180
        %1182 = vset.pattern.permute.xlu0 5
        %1183 = vperm.xlu0 %1182, %v154
        %v1184 = vpop.permute.xlu0 %1183
        %1185 = vset.pattern.permute.xlu0 5
        %1186 = vperm.xlu0 %1185, %v155
        %v1187 = vpop.permute.xlu0 %1186
        %1188 = vset.pattern.permute.xlu0 5
        %1189 = vperm.xlu0 %1188, %v156
        %v1190 = vpop.permute.xlu0 %1189
        %1191 = vset.pattern.permute.xlu0 5
        %1192 = vperm.xlu0 %1191, %v157
        %v1193 = vpop.permute.xlu0 %1192
        %1194 = vset.pattern.permute.xlu0 5
        %1195 = vperm.xlu0 %1194, %v158
        %v1196 = vpop.permute.xlu0 %1195
        %1197 = vset.pattern.permute.xlu0 5
        %1198 = vperm.xlu0 %1197, %v159
        %v1199 = vpop.permute.xlu0 %1198
        %1200 = vset.pattern.permute.xlu0 5
        %1201 = vperm.xlu0 %1200, %v160
        %v1202 = vpop.permute.xlu0 %1201
        %vm1203 = vcmp.eq.s32.totalorder %v162, %v1157
        %vm1204 = vcmp.eq.s32.totalorder %v162, %v1160
        %vm1205 = vcmp.eq.s32.totalorder %v162, %v1163
        %vm1206 = vcmp.eq.s32.totalorder %v162, %v1166
        %vm1207 = vcmp.eq.s32.totalorder %v162, %v1169
        %vm1208 = vcmp.eq.s32.totalorder %v162, %v1172
        %vm1209 = vcmp.eq.s32.totalorder %v162, %v1175
        %vm1210 = vcmp.eq.s32.totalorder %v162, %v1178
        %vm1211 = vcmp.eq.s32.totalorder %v162, %v1181
        %vm1212 = vcmp.eq.s32.totalorder %v162, %v1184
        %vm1213 = vcmp.eq.s32.totalorder %v162, %v1187
        %vm1214 = vcmp.eq.s32.totalorder %v162, %v1190
        %vm1215 = vcmp.eq.s32.totalorder %v162, %v1193
        %vm1216 = vcmp.eq.s32.totalorder %v162, %v1196
        %vm1217 = vcmp.eq.s32.totalorder %v162, %v1199
        %vm1218 = vcmp.eq.s32.totalorder %v162, %v1202
        %1219 = vset.pattern.permute.xlu0 5
        %1220 = vperm.xlu0 %1219, %v243
        %v1221 = vpop.permute.xlu0 %1220
        %1222 = vset.pattern.permute.xlu0 5
        %1223 = vperm.xlu0 %1222, %v244
        %v1224 = vpop.permute.xlu0 %1223
        %1225 = vset.pattern.permute.xlu0 5
        %1226 = vperm.xlu0 %1225, %v245
        %v1227 = vpop.permute.xlu0 %1226
        %1228 = vset.pattern.permute.xlu0 5
        %1229 = vperm.xlu0 %1228, %v246
        %v1230 = vpop.permute.xlu0 %1229
        %1231 = vset.pattern.permute.xlu0 5
        %1232 = vperm.xlu0 %1231, %v247
        %v1233 = vpop.permute.xlu0 %1232
        %1234 = vset.pattern.permute.xlu0 5
        %1235 = vperm.xlu0 %1234, %v248
        %v1236 = vpop.permute.xlu0 %1235
        %1237 = vset.pattern.permute.xlu0 5
        %1238 = vperm.xlu0 %1237, %v249
        %v1239 = vpop.permute.xlu0 %1238
        %1240 = vset.pattern.permute.xlu0 5
        %1241 = vperm.xlu0 %1240, %v250
        %v1242 = vpop.permute.xlu0 %1241
        %1243 = vset.pattern.permute.xlu0 5
        %1244 = vperm.xlu0 %1243, %v251
        %v1245 = vpop.permute.xlu0 %1244
        %1246 = vset.pattern.permute.xlu0 5
        %1247 = vperm.xlu0 %1246, %v252
        %v1248 = vpop.permute.xlu0 %1247
        %1249 = vset.pattern.permute.xlu0 5
        %1250 = vperm.xlu0 %1249, %v253
        %v1251 = vpop.permute.xlu0 %1250
        %1252 = vset.pattern.permute.xlu0 5
        %1253 = vperm.xlu0 %1252, %v254
        %v1254 = vpop.permute.xlu0 %1253
        %1255 = vset.pattern.permute.xlu0 5
        %1256 = vperm.xlu0 %1255, %v255
        %v1257 = vpop.permute.xlu0 %1256
        %1258 = vset.pattern.permute.xlu0 5
        %1259 = vperm.xlu0 %1258, %v256
        %v1260 = vpop.permute.xlu0 %1259
        %1261 = vset.pattern.permute.xlu0 5
        %1262 = vperm.xlu0 %1261, %v257
        %v1263 = vpop.permute.xlu0 %1262
        %1264 = vset.pattern.permute.xlu0 5
        %1265 = vperm.xlu0 %1264, %v258
        %v1266 = vpop.permute.xlu0 %1265
        %vm1267 = vcmp.eq.s32.totalorder %v1221, 1
        %vm1268 = vcmp.eq.s32.totalorder %v1224, 1
        %vm1269 = vcmp.eq.s32.totalorder %v1227, 1
        %vm1270 = vcmp.eq.s32.totalorder %v1230, 1
        %vm1271 = vcmp.eq.s32.totalorder %v1233, 1
        %vm1272 = vcmp.eq.s32.totalorder %v1236, 1
        %vm1273 = vcmp.eq.s32.totalorder %v1239, 1
        %vm1274 = vcmp.eq.s32.totalorder %v1242, 1
        %vm1275 = vcmp.eq.s32.totalorder %v1245, 1
        %vm1276 = vcmp.eq.s32.totalorder %v1248, 1
        %vm1277 = vcmp.eq.s32.totalorder %v1251, 1
        %vm1278 = vcmp.eq.s32.totalorder %v1254, 1
        %vm1279 = vcmp.eq.s32.totalorder %v1257, 1
        %vm1280 = vcmp.eq.s32.totalorder %v1260, 1
        %vm1281 = vcmp.eq.s32.totalorder %v1263, 1
        %vm1282 = vcmp.eq.s32.totalorder %v1266, 1
        %vm1283 = vmand %vm1203, %vm1267
        %vm1284 = vmand %vm1204, %vm1268
        %vm1285 = vmand %vm1205, %vm1269
        %vm1286 = vmand %vm1206, %vm1270
        %vm1287 = vmand %vm1207, %vm1271
        %vm1288 = vmand %vm1208, %vm1272
        %vm1289 = vmand %vm1209, %vm1273
        %vm1290 = vmand %vm1210, %vm1274
        %vm1291 = vmand %vm1211, %vm1275
        %vm1292 = vmand %vm1212, %vm1276
        %vm1293 = vmand %vm1213, %vm1277
        %vm1294 = vmand %vm1214, %vm1278
        %vm1295 = vmand %vm1215, %vm1279
        %vm1296 = vmand %vm1216, %vm1280
        %vm1297 = vmand %vm1217, %vm1281
        %vm1298 = vmand %vm1218, %vm1282
        %v1299 = vsel %vm1283, 1, 0
        %v1300 = vsel %vm1284, 1, 0
        %v1301 = vsel %vm1285, 1, 0
        %v1302 = vsel %vm1286, 1, 0
        %v1303 = vsel %vm1287, 1, 0
        %v1304 = vsel %vm1288, 1, 0
        %v1305 = vsel %vm1289, 1, 0
        %v1306 = vsel %vm1290, 1, 0
        %v1307 = vsel %vm1291, 1, 0
        %v1308 = vsel %vm1292, 1, 0
        %v1309 = vsel %vm1293, 1, 0
        %v1310 = vsel %vm1294, 1, 0
        %v1311 = vsel %vm1295, 1, 0
        %v1312 = vsel %vm1296, 1, 0
        %v1313 = vsel %vm1297, 1, 0
        %v1314 = vsel %vm1298, 1, 0
        %v1315 = vcvt.s32.f32 %v1299
        %v1316 = vcvt.s32.f32 %v1300
        %v1317 = vcvt.s32.f32 %v1301
        %v1318 = vcvt.s32.f32 %v1302
        %v1319 = vcvt.s32.f32 %v1303
        %v1320 = vcvt.s32.f32 %v1304
        %v1321 = vcvt.s32.f32 %v1305
        %v1322 = vcvt.s32.f32 %v1306
        %v1323 = vcvt.s32.f32 %v1307
        %v1324 = vcvt.s32.f32 %v1308
        %v1325 = vcvt.s32.f32 %v1309
        %v1326 = vcvt.s32.f32 %v1310
        %v1327 = vcvt.s32.f32 %v1311
        %v1328 = vcvt.s32.f32 %v1312
        %v1329 = vcvt.s32.f32 %v1313
        %v1330 = vcvt.s32.f32 %v1314
        %v1331 = vadd.f32 %v1139, %v1315
        %v1332 = vadd.f32 %v1140, %v1316
        %v1333 = vadd.f32 %v1141, %v1317
        %v1334 = vadd.f32 %v1142, %v1318
        %v1335 = vadd.f32 %v1143, %v1319
        %v1336 = vadd.f32 %v1144, %v1320
        %v1337 = vadd.f32 %v1145, %v1321
        %v1338 = vadd.f32 %v1146, %v1322
        %v1339 = vadd.f32 %v1147, %v1323
        %v1340 = vadd.f32 %v1148, %v1324
        %v1341 = vadd.f32 %v1149, %v1325
        %v1342 = vadd.f32 %v1150, %v1326
        %v1343 = vadd.f32 %v1151, %v1327
        %v1344 = vadd.f32 %v1152, %v1328
        %v1345 = vadd.f32 %v1153, %v1329
        %v1346 = vadd.f32 %v1154, %v1330
        %1347 = vset.pattern.permute.xlu0 6
        %1348 = vperm.xlu0 %1347, %v145
        %v1349 = vpop.permute.xlu0 %1348
        %1350 = vset.pattern.permute.xlu0 6
        %1351 = vperm.xlu0 %1350, %v146
        %v1352 = vpop.permute.xlu0 %1351
        %1353 = vset.pattern.permute.xlu0 6
        %1354 = vperm.xlu0 %1353, %v147
        %v1355 = vpop.permute.xlu0 %1354
        %1356 = vset.pattern.permute.xlu0 6
        %1357 = vperm.xlu0 %1356, %v148
        %v1358 = vpop.permute.xlu0 %1357
        %1359 = vset.pattern.permute.xlu0 6
        %1360 = vperm.xlu0 %1359, %v149
        %v1361 = vpop.permute.xlu0 %1360
        %1362 = vset.pattern.permute.xlu0 6
        %1363 = vperm.xlu0 %1362, %v150
        %v1364 = vpop.permute.xlu0 %1363
        %1365 = vset.pattern.permute.xlu0 6
        %1366 = vperm.xlu0 %1365, %v151
        %v1367 = vpop.permute.xlu0 %1366
        %1368 = vset.pattern.permute.xlu0 6
        %1369 = vperm.xlu0 %1368, %v152
        %v1370 = vpop.permute.xlu0 %1369
        %1371 = vset.pattern.permute.xlu0 6
        %1372 = vperm.xlu0 %1371, %v153
        %v1373 = vpop.permute.xlu0 %1372
        %1374 = vset.pattern.permute.xlu0 6
        %1375 = vperm.xlu0 %1374, %v154
        %v1376 = vpop.permute.xlu0 %1375
        %1377 = vset.pattern.permute.xlu0 6
        %1378 = vperm.xlu0 %1377, %v155
        %v1379 = vpop.permute.xlu0 %1378
        %1380 = vset.pattern.permute.xlu0 6
        %1381 = vperm.xlu0 %1380, %v156
        %v1382 = vpop.permute.xlu0 %1381
        %1383 = vset.pattern.permute.xlu0 6
        %1384 = vperm.xlu0 %1383, %v157
        %v1385 = vpop.permute.xlu0 %1384
        %1386 = vset.pattern.permute.xlu0 6
        %1387 = vperm.xlu0 %1386, %v158
        %v1388 = vpop.permute.xlu0 %1387
        %1389 = vset.pattern.permute.xlu0 6
        %1390 = vperm.xlu0 %1389, %v159
        %v1391 = vpop.permute.xlu0 %1390
        %1392 = vset.pattern.permute.xlu0 6
        %1393 = vperm.xlu0 %1392, %v160
        %v1394 = vpop.permute.xlu0 %1393
        %vm1395 = vcmp.eq.s32.totalorder %v162, %v1349
        %vm1396 = vcmp.eq.s32.totalorder %v162, %v1352
        %vm1397 = vcmp.eq.s32.totalorder %v162, %v1355
        %vm1398 = vcmp.eq.s32.totalorder %v162, %v1358
        %vm1399 = vcmp.eq.s32.totalorder %v162, %v1361
        %vm1400 = vcmp.eq.s32.totalorder %v162, %v1364
        %vm1401 = vcmp.eq.s32.totalorder %v162, %v1367
        %vm1402 = vcmp.eq.s32.totalorder %v162, %v1370
        %vm1403 = vcmp.eq.s32.totalorder %v162, %v1373
        %vm1404 = vcmp.eq.s32.totalorder %v162, %v1376
        %vm1405 = vcmp.eq.s32.totalorder %v162, %v1379
        %vm1406 = vcmp.eq.s32.totalorder %v162, %v1382
        %vm1407 = vcmp.eq.s32.totalorder %v162, %v1385
        %vm1408 = vcmp.eq.s32.totalorder %v162, %v1388
        %vm1409 = vcmp.eq.s32.totalorder %v162, %v1391
        %vm1410 = vcmp.eq.s32.totalorder %v162, %v1394
        %1411 = vset.pattern.permute.xlu0 6
        %1412 = vperm.xlu0 %1411, %v243
        %v1413 = vpop.permute.xlu0 %1412
        %1414 = vset.pattern.permute.xlu0 6
        %1415 = vperm.xlu0 %1414, %v244
        %v1416 = vpop.permute.xlu0 %1415
        %1417 = vset.pattern.permute.xlu0 6
        %1418 = vperm.xlu0 %1417, %v245
        %v1419 = vpop.permute.xlu0 %1418
        %1420 = vset.pattern.permute.xlu0 6
        %1421 = vperm.xlu0 %1420, %v246
        %v1422 = vpop.permute.xlu0 %1421
        %1423 = vset.pattern.permute.xlu0 6
        %1424 = vperm.xlu0 %1423, %v247
        %v1425 = vpop.permute.xlu0 %1424
        %1426 = vset.pattern.permute.xlu0 6
        %1427 = vperm.xlu0 %1426, %v248
        %v1428 = vpop.permute.xlu0 %1427
        %1429 = vset.pattern.permute.xlu0 6
        %1430 = vperm.xlu0 %1429, %v249
        %v1431 = vpop.permute.xlu0 %1430
        %1432 = vset.pattern.permute.xlu0 6
        %1433 = vperm.xlu0 %1432, %v250
        %v1434 = vpop.permute.xlu0 %1433
        %1435 = vset.pattern.permute.xlu0 6
        %1436 = vperm.xlu0 %1435, %v251
        %v1437 = vpop.permute.xlu0 %1436
        %1438 = vset.pattern.permute.xlu0 6
        %1439 = vperm.xlu0 %1438, %v252
        %v1440 = vpop.permute.xlu0 %1439
        %1441 = vset.pattern.permute.xlu0 6
        %1442 = vperm.xlu0 %1441, %v253
        %v1443 = vpop.permute.xlu0 %1442
        %1444 = vset.pattern.permute.xlu0 6
        %1445 = vperm.xlu0 %1444, %v254
        %v1446 = vpop.permute.xlu0 %1445
        %1447 = vset.pattern.permute.xlu0 6
        %1448 = vperm.xlu0 %1447, %v255
        %v1449 = vpop.permute.xlu0 %1448
        %1450 = vset.pattern.permute.xlu0 6
        %1451 = vperm.xlu0 %1450, %v256
        %v1452 = vpop.permute.xlu0 %1451
        %1453 = vset.pattern.permute.xlu0 6
        %1454 = vperm.xlu0 %1453, %v257
        %v1455 = vpop.permute.xlu0 %1454
        %1456 = vset.pattern.permute.xlu0 6
        %1457 = vperm.xlu0 %1456, %v258
        %v1458 = vpop.permute.xlu0 %1457
        %vm1459 = vcmp.eq.s32.totalorder %v1413, 1
        %vm1460 = vcmp.eq.s32.totalorder %v1416, 1
        %vm1461 = vcmp.eq.s32.totalorder %v1419, 1
        %vm1462 = vcmp.eq.s32.totalorder %v1422, 1
        %vm1463 = vcmp.eq.s32.totalorder %v1425, 1
        %vm1464 = vcmp.eq.s32.totalorder %v1428, 1
        %vm1465 = vcmp.eq.s32.totalorder %v1431, 1
        %vm1466 = vcmp.eq.s32.totalorder %v1434, 1
        %vm1467 = vcmp.eq.s32.totalorder %v1437, 1
        %vm1468 = vcmp.eq.s32.totalorder %v1440, 1
        %vm1469 = vcmp.eq.s32.totalorder %v1443, 1
        %vm1470 = vcmp.eq.s32.totalorder %v1446, 1
        %vm1471 = vcmp.eq.s32.totalorder %v1449, 1
        %vm1472 = vcmp.eq.s32.totalorder %v1452, 1
        %vm1473 = vcmp.eq.s32.totalorder %v1455, 1
        %vm1474 = vcmp.eq.s32.totalorder %v1458, 1
        %vm1475 = vmand %vm1395, %vm1459
        %vm1476 = vmand %vm1396, %vm1460
        %vm1477 = vmand %vm1397, %vm1461
        %vm1478 = vmand %vm1398, %vm1462
        %vm1479 = vmand %vm1399, %vm1463
        %vm1480 = vmand %vm1400, %vm1464
        %vm1481 = vmand %vm1401, %vm1465
        %vm1482 = vmand %vm1402, %vm1466
        %vm1483 = vmand %vm1403, %vm1467
        %vm1484 = vmand %vm1404, %vm1468
        %vm1485 = vmand %vm1405, %vm1469
        %vm1486 = vmand %vm1406, %vm1470
        %vm1487 = vmand %vm1407, %vm1471
        %vm1488 = vmand %vm1408, %vm1472
        %vm1489 = vmand %vm1409, %vm1473
        %vm1490 = vmand %vm1410, %vm1474
        %v1491 = vsel %vm1475, 1, 0
        %v1492 = vsel %vm1476, 1, 0
        %v1493 = vsel %vm1477, 1, 0
        %v1494 = vsel %vm1478, 1, 0
        %v1495 = vsel %vm1479, 1, 0
        %v1496 = vsel %vm1480, 1, 0
        %v1497 = vsel %vm1481, 1, 0
        %v1498 = vsel %vm1482, 1, 0
        %v1499 = vsel %vm1483, 1, 0
        %v1500 = vsel %vm1484, 1, 0
        %v1501 = vsel %vm1485, 1, 0
        %v1502 = vsel %vm1486, 1, 0
        %v1503 = vsel %vm1487, 1, 0
        %v1504 = vsel %vm1488, 1, 0
        %v1505 = vsel %vm1489, 1, 0
        %v1506 = vsel %vm1490, 1, 0
        %v1507 = vcvt.s32.f32 %v1491
        %v1508 = vcvt.s32.f32 %v1492
        %v1509 = vcvt.s32.f32 %v1493
        %v1510 = vcvt.s32.f32 %v1494
        %v1511 = vcvt.s32.f32 %v1495
        %v1512 = vcvt.s32.f32 %v1496
        %v1513 = vcvt.s32.f32 %v1497
        %v1514 = vcvt.s32.f32 %v1498
        %v1515 = vcvt.s32.f32 %v1499
        %v1516 = vcvt.s32.f32 %v1500
        %v1517 = vcvt.s32.f32 %v1501
        %v1518 = vcvt.s32.f32 %v1502
        %v1519 = vcvt.s32.f32 %v1503
        %v1520 = vcvt.s32.f32 %v1504
        %v1521 = vcvt.s32.f32 %v1505
        %v1522 = vcvt.s32.f32 %v1506
        %v1523 = vadd.f32 %v1331, %v1507
        %v1524 = vadd.f32 %v1332, %v1508
        %v1525 = vadd.f32 %v1333, %v1509
        %v1526 = vadd.f32 %v1334, %v1510
        %v1527 = vadd.f32 %v1335, %v1511
        %v1528 = vadd.f32 %v1336, %v1512
        %v1529 = vadd.f32 %v1337, %v1513
        %v1530 = vadd.f32 %v1338, %v1514
        %v1531 = vadd.f32 %v1339, %v1515
        %v1532 = vadd.f32 %v1340, %v1516
        %v1533 = vadd.f32 %v1341, %v1517
        %v1534 = vadd.f32 %v1342, %v1518
        %v1535 = vadd.f32 %v1343, %v1519
        %v1536 = vadd.f32 %v1344, %v1520
        %v1537 = vadd.f32 %v1345, %v1521
        %v1538 = vadd.f32 %v1346, %v1522
        %1539 = vset.pattern.permute.xlu0 7
        %1540 = vperm.xlu0 %1539, %v145
        %v1541 = vpop.permute.xlu0 %1540
        %1542 = vset.pattern.permute.xlu0 7
        %1543 = vperm.xlu0 %1542, %v146
        %v1544 = vpop.permute.xlu0 %1543
        %1545 = vset.pattern.permute.xlu0 7
        %1546 = vperm.xlu0 %1545, %v147
        %v1547 = vpop.permute.xlu0 %1546
        %1548 = vset.pattern.permute.xlu0 7
        %1549 = vperm.xlu0 %1548, %v148
        %v1550 = vpop.permute.xlu0 %1549
        %1551 = vset.pattern.permute.xlu0 7
        %1552 = vperm.xlu0 %1551, %v149
        %v1553 = vpop.permute.xlu0 %1552
        %1554 = vset.pattern.permute.xlu0 7
        %1555 = vperm.xlu0 %1554, %v150
        %v1556 = vpop.permute.xlu0 %1555
        %1557 = vset.pattern.permute.xlu0 7
        %1558 = vperm.xlu0 %1557, %v151
        %v1559 = vpop.permute.xlu0 %1558
        %1560 = vset.pattern.permute.xlu0 7
        %1561 = vperm.xlu0 %1560, %v152
        %v1562 = vpop.permute.xlu0 %1561
        %1563 = vset.pattern.permute.xlu0 7
        %1564 = vperm.xlu0 %1563, %v153
        %v1565 = vpop.permute.xlu0 %1564
        %1566 = vset.pattern.permute.xlu0 7
        %1567 = vperm.xlu0 %1566, %v154
        %v1568 = vpop.permute.xlu0 %1567
        %1569 = vset.pattern.permute.xlu0 7
        %1570 = vperm.xlu0 %1569, %v155
        %v1571 = vpop.permute.xlu0 %1570
        %1572 = vset.pattern.permute.xlu0 7
        %1573 = vperm.xlu0 %1572, %v156
        %v1574 = vpop.permute.xlu0 %1573
        %1575 = vset.pattern.permute.xlu0 7
        %1576 = vperm.xlu0 %1575, %v157
        %v1577 = vpop.permute.xlu0 %1576
        %1578 = vset.pattern.permute.xlu0 7
        %1579 = vperm.xlu0 %1578, %v158
        %v1580 = vpop.permute.xlu0 %1579
        %1581 = vset.pattern.permute.xlu0 7
        %1582 = vperm.xlu0 %1581, %v159
        %v1583 = vpop.permute.xlu0 %1582
        %1584 = vset.pattern.permute.xlu0 7
        %1585 = vperm.xlu0 %1584, %v160
        %v1586 = vpop.permute.xlu0 %1585
        %vm1587 = vcmp.eq.s32.totalorder %v162, %v1541
        %vm1588 = vcmp.eq.s32.totalorder %v162, %v1544
        %vm1589 = vcmp.eq.s32.totalorder %v162, %v1547
        %vm1590 = vcmp.eq.s32.totalorder %v162, %v1550
        %vm1591 = vcmp.eq.s32.totalorder %v162, %v1553
        %vm1592 = vcmp.eq.s32.totalorder %v162, %v1556
        %vm1593 = vcmp.eq.s32.totalorder %v162, %v1559
        %vm1594 = vcmp.eq.s32.totalorder %v162, %v1562
        %vm1595 = vcmp.eq.s32.totalorder %v162, %v1565
        %vm1596 = vcmp.eq.s32.totalorder %v162, %v1568
        %vm1597 = vcmp.eq.s32.totalorder %v162, %v1571
        %vm1598 = vcmp.eq.s32.totalorder %v162, %v1574
        %vm1599 = vcmp.eq.s32.totalorder %v162, %v1577
        %vm1600 = vcmp.eq.s32.totalorder %v162, %v1580
        %vm1601 = vcmp.eq.s32.totalorder %v162, %v1583
        %vm1602 = vcmp.eq.s32.totalorder %v162, %v1586
        %1603 = vset.pattern.permute.xlu0 7
        %1604 = vperm.xlu0 %1603, %v243
        %v1605 = vpop.permute.xlu0 %1604
        %1606 = vset.pattern.permute.xlu0 7
        %1607 = vperm.xlu0 %1606, %v244
        %v1608 = vpop.permute.xlu0 %1607
        %1609 = vset.pattern.permute.xlu0 7
        %1610 = vperm.xlu0 %1609, %v245
        %v1611 = vpop.permute.xlu0 %1610
        %1612 = vset.pattern.permute.xlu0 7
        %1613 = vperm.xlu0 %1612, %v246
        %v1614 = vpop.permute.xlu0 %1613
        %1615 = vset.pattern.permute.xlu0 7
        %1616 = vperm.xlu0 %1615, %v247
        %v1617 = vpop.permute.xlu0 %1616
        %1618 = vset.pattern.permute.xlu0 7
        %1619 = vperm.xlu0 %1618, %v248
        %v1620 = vpop.permute.xlu0 %1619
        %1621 = vset.pattern.permute.xlu0 7
        %1622 = vperm.xlu0 %1621, %v249
        %v1623 = vpop.permute.xlu0 %1622
        %1624 = vset.pattern.permute.xlu0 7
        %1625 = vperm.xlu0 %1624, %v250
        %v1626 = vpop.permute.xlu0 %1625
        %1627 = vset.pattern.permute.xlu0 7
        %1628 = vperm.xlu0 %1627, %v251
        %v1629 = vpop.permute.xlu0 %1628
        %1630 = vset.pattern.permute.xlu0 7
        %1631 = vperm.xlu0 %1630, %v252
        %v1632 = vpop.permute.xlu0 %1631
        %1633 = vset.pattern.permute.xlu0 7
        %1634 = vperm.xlu0 %1633, %v253
        %v1635 = vpop.permute.xlu0 %1634
        %1636 = vset.pattern.permute.xlu0 7
        %1637 = vperm.xlu0 %1636, %v254
        %v1638 = vpop.permute.xlu0 %1637
        %1639 = vset.pattern.permute.xlu0 7
        %1640 = vperm.xlu0 %1639, %v255
        %v1641 = vpop.permute.xlu0 %1640
        %1642 = vset.pattern.permute.xlu0 7
        %1643 = vperm.xlu0 %1642, %v256
        %v1644 = vpop.permute.xlu0 %1643
        %1645 = vset.pattern.permute.xlu0 7
        %1646 = vperm.xlu0 %1645, %v257
        %v1647 = vpop.permute.xlu0 %1646
        %1648 = vset.pattern.permute.xlu0 7
        %1649 = vperm.xlu0 %1648, %v258
        %v1650 = vpop.permute.xlu0 %1649
        %vm1651 = vcmp.eq.s32.totalorder %v1605, 1
        %vm1652 = vcmp.eq.s32.totalorder %v1608, 1
        %vm1653 = vcmp.eq.s32.totalorder %v1611, 1
        %vm1654 = vcmp.eq.s32.totalorder %v1614, 1
        %vm1655 = vcmp.eq.s32.totalorder %v1617, 1
        %vm1656 = vcmp.eq.s32.totalorder %v1620, 1
        %vm1657 = vcmp.eq.s32.totalorder %v1623, 1
        %vm1658 = vcmp.eq.s32.totalorder %v1626, 1
        %vm1659 = vcmp.eq.s32.totalorder %v1629, 1
        %vm1660 = vcmp.eq.s32.totalorder %v1632, 1
        %vm1661 = vcmp.eq.s32.totalorder %v1635, 1
        %vm1662 = vcmp.eq.s32.totalorder %v1638, 1
        %vm1663 = vcmp.eq.s32.totalorder %v1641, 1
        %vm1664 = vcmp.eq.s32.totalorder %v1644, 1
        %vm1665 = vcmp.eq.s32.totalorder %v1647, 1
        %vm1666 = vcmp.eq.s32.totalorder %v1650, 1
        %vm1667 = vmand %vm1587, %vm1651
        %vm1668 = vmand %vm1588, %vm1652
        %vm1669 = vmand %vm1589, %vm1653
        %vm1670 = vmand %vm1590, %vm1654
        %vm1671 = vmand %vm1591, %vm1655
        %vm1672 = vmand %vm1592, %vm1656
        %vm1673 = vmand %vm1593, %vm1657
        %vm1674 = vmand %vm1594, %vm1658
        %vm1675 = vmand %vm1595, %vm1659
        %vm1676 = vmand %vm1596, %vm1660
        %vm1677 = vmand %vm1597, %vm1661
        %vm1678 = vmand %vm1598, %vm1662
        %vm1679 = vmand %vm1599, %vm1663
        %vm1680 = vmand %vm1600, %vm1664
        %vm1681 = vmand %vm1601, %vm1665
        %vm1682 = vmand %vm1602, %vm1666
        %v1683 = vsel %vm1667, 1, 0
        %v1684 = vsel %vm1668, 1, 0
        %v1685 = vsel %vm1669, 1, 0
        %v1686 = vsel %vm1670, 1, 0
        %v1687 = vsel %vm1671, 1, 0
        %v1688 = vsel %vm1672, 1, 0
        %v1689 = vsel %vm1673, 1, 0
        %v1690 = vsel %vm1674, 1, 0
        %v1691 = vsel %vm1675, 1, 0
        %v1692 = vsel %vm1676, 1, 0
        %v1693 = vsel %vm1677, 1, 0
        %v1694 = vsel %vm1678, 1, 0
        %v1695 = vsel %vm1679, 1, 0
        %v1696 = vsel %vm1680, 1, 0
        %v1697 = vsel %vm1681, 1, 0
        %v1698 = vsel %vm1682, 1, 0
        %v1699 = vcvt.s32.f32 %v1683
        %v1700 = vcvt.s32.f32 %v1684
        %v1701 = vcvt.s32.f32 %v1685
        %v1702 = vcvt.s32.f32 %v1686
        %v1703 = vcvt.s32.f32 %v1687
        %v1704 = vcvt.s32.f32 %v1688
        %v1705 = vcvt.s32.f32 %v1689
        %v1706 = vcvt.s32.f32 %v1690
        %v1707 = vcvt.s32.f32 %v1691
        %v1708 = vcvt.s32.f32 %v1692
        %v1709 = vcvt.s32.f32 %v1693
        %v1710 = vcvt.s32.f32 %v1694
        %v1711 = vcvt.s32.f32 %v1695
        %v1712 = vcvt.s32.f32 %v1696
        %v1713 = vcvt.s32.f32 %v1697
        %v1714 = vcvt.s32.f32 %v1698
        %v1715 = vadd.f32 %v1523, %v1699
        %v1716 = vadd.f32 %v1524, %v1700
        %v1717 = vadd.f32 %v1525, %v1701
        %v1718 = vadd.f32 %v1526, %v1702
        %v1719 = vadd.f32 %v1527, %v1703
        %v1720 = vadd.f32 %v1528, %v1704
        %v1721 = vadd.f32 %v1529, %v1705
        %v1722 = vadd.f32 %v1530, %v1706
        %v1723 = vadd.f32 %v1531, %v1707
        %v1724 = vadd.f32 %v1532, %v1708
        %v1725 = vadd.f32 %v1533, %v1709
        %v1726 = vadd.f32 %v1534, %v1710
        %v1727 = vadd.f32 %v1535, %v1711
        %v1728 = vadd.f32 %v1536, %v1712
        %v1729 = vadd.f32 %v1537, %v1713
        %v1730 = vadd.f32 %v1538, %v1714
        %v1731 = vcvt.s32.f32 %v243
        %v1732 = vcvt.s32.f32 %v244
        %v1733 = vcvt.s32.f32 %v245
        %v1734 = vcvt.s32.f32 %v246
        %v1735 = vcvt.s32.f32 %v247
        %v1736 = vcvt.s32.f32 %v248
        %v1737 = vcvt.s32.f32 %v249
        %v1738 = vcvt.s32.f32 %v250
        %v1739 = vcvt.s32.f32 %v251
        %v1740 = vcvt.s32.f32 %v252
        %v1741 = vcvt.s32.f32 %v253
        %v1742 = vcvt.s32.f32 %v254
        %v1743 = vcvt.s32.f32 %v255
        %v1744 = vcvt.s32.f32 %v256
        %v1745 = vcvt.s32.f32 %v257
        %v1746 = vcvt.s32.f32 %v258
        %vm1747 = vcmask 64512
        %v1748 = vsel %vm1747, %v1731, 0.0
        %1749 = vadd.xlane.f32.xlu0 %v1748
        %v1750 = vpop.xlane.xlu0 %1749
        %v1751 = vsel %vm1747, %v1732, 0.0
        %1752 = vadd.xlane.f32.xlu0 %v1751
        %v1753 = vpop.xlane.xlu0 %1752
        %v1754 = vsel %vm1747, %v1733, 0.0
        %1755 = vadd.xlane.f32.xlu0 %v1754
        %v1756 = vpop.xlane.xlu0 %1755
        %v1757 = vsel %vm1747, %v1734, 0.0
        %1758 = vadd.xlane.f32.xlu0 %v1757
        %v1759 = vpop.xlane.xlu0 %1758
        %v1760 = vsel %vm1747, %v1735, 0.0
        %1761 = vadd.xlane.f32.xlu0 %v1760
        %v1762 = vpop.xlane.xlu0 %1761
        %v1763 = vsel %vm1747, %v1736, 0.0
        %1764 = vadd.xlane.f32.xlu0 %v1763
        %v1765 = vpop.xlane.xlu0 %1764
        %v1766 = vsel %vm1747, %v1737, 0.0
        %1767 = vadd.xlane.f32.xlu0 %v1766
        %v1768 = vpop.xlane.xlu0 %1767
        %v1769 = vsel %vm1747, %v1738, 0.0
        %1770 = vadd.xlane.f32.xlu0 %v1769
        %v1771 = vpop.xlane.xlu0 %1770
        %v1772 = vsel %vm1747, %v1739, 0.0
        %1773 = vadd.xlane.f32.xlu0 %v1772
        %v1774 = vpop.xlane.xlu0 %1773
        %v1775 = vsel %vm1747, %v1740, 0.0
        %1776 = vadd.xlane.f32.xlu0 %v1775
        %v1777 = vpop.xlane.xlu0 %1776
        %v1778 = vsel %vm1747, %v1741, 0.0
        %1779 = vadd.xlane.f32.xlu0 %v1778
        %v1780 = vpop.xlane.xlu0 %1779
        %v1781 = vsel %vm1747, %v1742, 0.0
        %1782 = vadd.xlane.f32.xlu0 %v1781
        %v1783 = vpop.xlane.xlu0 %1782
        %v1784 = vsel %vm1747, %v1743, 0.0
        %1785 = vadd.xlane.f32.xlu0 %v1784
        %v1786 = vpop.xlane.xlu0 %1785
        %v1787 = vsel %vm1747, %v1744, 0.0
        %1788 = vadd.xlane.f32.xlu0 %v1787
        %v1789 = vpop.xlane.xlu0 %1788
        %v1790 = vsel %vm1747, %v1745, 0.0
        %1791 = vadd.xlane.f32.xlu0 %v1790
        %v1792 = vpop.xlane.xlu0 %1791
        %v1793 = vsel %vm1747, %v1746, 0.0
        %1794 = vadd.xlane.f32.xlu0 %v1793
        %v1795 = vpop.xlane.xlu0 %1794
        %v1796 = vmax.f32 %v1750, 1.0
        %v1797 = vmax.f32 %v1753, 1.0
        %v1798 = vmax.f32 %v1756, 1.0
        %v1799 = vmax.f32 %v1759, 1.0
        %v1800 = vmax.f32 %v1762, 1.0
        %v1801 = vmax.f32 %v1765, 1.0
        %v1802 = vmax.f32 %v1768, 1.0
        %v1803 = vmax.f32 %v1771, 1.0
        %v1804 = vmax.f32 %v1774, 1.0
        %v1805 = vmax.f32 %v1777, 1.0
        %v1806 = vmax.f32 %v1780, 1.0
        %v1807 = vmax.f32 %v1783, 1.0
        %v1808 = vmax.f32 %v1786, 1.0
        %v1809 = vmax.f32 %v1789, 1.0
        %v1810 = vmax.f32 %v1792, 1.0
        %v1811 = vmax.f32 %v1795, 1.0
        %v1812 = vrcp.pop %v1796
        %v1813 = vrcp.pop %v1797
        %v1814 = vrcp.pop %v1798
        %v1815 = vrcp.pop %v1799
        %v1816 = vrcp.pop %v1800
        %v1817 = vrcp.pop %v1801
        %v1818 = vrcp.pop %v1802
        %v1819 = vrcp.pop %v1803
        %v1820 = vrcp.pop %v1804
        %v1821 = vrcp.pop %v1805
        %v1822 = vrcp.pop %v1806
        %v1823 = vrcp.pop %v1807
        %v1824 = vrcp.pop %v1808
        %v1825 = vrcp.pop %v1809
        %v1826 = vrcp.pop %v1810
        %v1827 = vrcp.pop %v1811
        %v1828 = vmul.f32 %v1715, %v1812
        %v1829 = vmul.f32 %v1716, %v1813
        %v1830 = vmul.f32 %v1717, %v1814
        %v1831 = vmul.f32 %v1718, %v1815
        %v1832 = vmul.f32 %v1719, %v1816
        %v1833 = vmul.f32 %v1720, %v1817
        %v1834 = vmul.f32 %v1721, %v1818
        %v1835 = vmul.f32 %v1722, %v1819
        %v1836 = vmul.f32 %v1723, %v1820
        %v1837 = vmul.f32 %v1724, %v1821
        %v1838 = vmul.f32 %v1725, %v1822
        %v1839 = vmul.f32 %v1726, %v1823
        %v1840 = vmul.f32 %v1727, %v1824
        %v1841 = vmul.f32 %v1728, %v1825
        %v1842 = vmul.f32 %v1729, %v1826
        %v1843 = vmul.f32 %v1730, %v1827
        %v1844 = vld [vmem:[%s1] sm:$0xff]
        %v1845 = vld [vmem:[%s1 + $0x8] sm:$0xff]
        %v1846 = vld [vmem:[%s1 + $0x10] sm:$0xff]
        %v1847 = vld [vmem:[%s1 + $0x18] sm:$0xff]
        %v1848 = vld [vmem:[%s1 + $0x20] sm:$0xff]
        %v1849 = vld [vmem:[%s1 + $0x28] sm:$0xff]
        %v1850 = vld [vmem:[%s1 + $0x30] sm:$0xff]
        %v1851 = vld [vmem:[%s1 + $0x38] sm:$0xff]
        %v1852 = vld [vmem:[%s1 + $0x40] sm:$0xff]
        %v1853 = vld [vmem:[%s1 + $0x48] sm:$0xff]
        %v1854 = vld [vmem:[%s1 + $0x50] sm:$0xff]
        %v1855 = vld [vmem:[%s1 + $0x58] sm:$0xff]
        %v1856 = vld [vmem:[%s1 + $0x60] sm:$0xff]
        %v1857 = vld [vmem:[%s1 + $0x68] sm:$0xff]
        %v1858 = vld [vmem:[%s1 + $0x70] sm:$0xff]
        %v1859 = vld [vmem:[%s1 + $0x78] sm:$0xff]
        %1860 = vmatprep.subr.mxu0 0.0
        %1861 = vmatpush1.msra.mxu0 %v1844
        %1862 = vmatprep.subr.mxu0 0.0
        %1863 = vmatpush1.msra.mxu0 %v1845
        %1864 = vmatprep.subr.mxu0 0.0
        %1865 = vmatpush1.msra.mxu0 %v1846
        %1866 = vmatprep.subr.mxu0 0.0
        %1867 = vmatpush1.msra.mxu0 %v1847
        %1868 = vmatprep.subr.mxu0 0.0
        %1869 = vmatpush1.msra.mxu0 %v1848
        %1870 = vmatprep.subr.mxu0 0.0
        %1871 = vmatpush1.msra.mxu0 %v1849
        %1872 = vmatprep.subr.mxu0 0.0
        %1873 = vmatpush1.msra.mxu0 %v1850
        %1874 = vmatprep.subr.mxu0 0.0
        %1875 = vmatpush1.msra.mxu0 %v1851
        %1876 = vmatprep.subr.mxu0 0.0
        %1877 = vmatpush1.msra.mxu0 %v1852
        %1878 = vmatprep.subr.mxu0 0.0
        %1879 = vmatpush1.msra.mxu0 %v1853
        %1880 = vmatprep.subr.mxu0 0.0
        %1881 = vmatpush1.msra.mxu0 %v1854
        %1882 = vmatprep.subr.mxu0 0.0
        %1883 = vmatpush1.msra.mxu0 %v1855
        %1884 = vmatprep.subr.mxu0 0.0
        %1885 = vmatpush1.msra.mxu0 %v1856
        %1886 = vmatprep.subr.mxu0 0.0
        %1887 = vmatpush1.msra.mxu0 %v1857
        %1888 = vmatprep.subr.mxu0 0.0
        %1889 = vmatpush1.msra.mxu0 %v1858
        %1890 = vmatprep.subr.mxu0 0.0
        %1891 = vmatpush1.msra.mxu0 %v1859
        %1892 = vmatprep.subr.mxu0 0.0
        %1893 = vmatpush1.msra.mxu0 0.0
        %1894 = vmatprep.subr.mxu0 0.0
        %1895 = vmatpush1.msra.mxu0 0.0
        %1896 = vmatprep.subr.mxu0 0.0
        %1897 = vmatpush1.msra.mxu0 0.0
        %1898 = vmatprep.subr.mxu0 0.0
        %1899 = vmatpush1.msra.mxu0 0.0
        %1900 = vmatprep.subr.mxu0 0.0
        %1901 = vmatpush1.msra.mxu0 0.0
        %1902 = vmatprep.subr.mxu0 0.0
        %1903 = vmatpush1.msra.mxu0 0.0
        %1904 = vmatprep.subr.mxu0 0.0
        %1905 = vmatpush1.msra.mxu0 0.0
        %1906 = vmatprep.subr.mxu0 0.0
        %1907 = vmatpush1.msra.mxu0 0.0
        %1908 = vmatprep.subr.mxu0 0.0
        %1909 = vmatpush1.msra.mxu0 0.0
        %1910 = vmatprep.subr.mxu0 0.0
        %1911 = vmatpush1.msra.mxu0 0.0
        %1912 = vmatprep.subr.mxu0 0.0
        %1913 = vmatpush1.msra.mxu0 0.0
        %1914 = vmatprep.subr.mxu0 0.0
        %1915 = vmatpush1.msra.mxu0 0.0
        %1916 = vmatprep.subr.mxu0 0.0
        %1917 = vmatpush1.msra.mxu0 0.0
        %1918 = vmatprep.subr.mxu0 0.0
        %1919 = vmatpush1.msra.mxu0 0.0
        %1920 = vmatprep.subr.mxu0 0.0
        %1921 = vmatpush1.msra.mxu0 0.0
        %1922 = vmatprep.subr.mxu0 0.0
        %1923 = vmatpush1.msra.mxu0 0.0
        %1924 = vmatprep.mubr.f32.mxu0 0.0
        %1925 = vmatmul.mubr.f32.gmra.mrb[0].mxu0 %v1828
        %v1926 = vpop.f32.mrb[0].mxu0
        %v1927 = vadd.f32 0.0, %v1926
        %v1928 = vpop.f32.mrb[0].mxu0
        %1929 = vmatprep.mubr.f32.mxu0 0.0
        %1930 = vmatmul.mubr.f32.gmra.mrb[0].mxu0 %v1829
        %v1931 = vpop.f32.mrb[0].mxu0
        %v1932 = vadd.f32 0.0, %v1931
        %v1933 = vpop.f32.mrb[0].mxu0
        %1934 = vmatprep.mubr.f32.mxu0 0.0
        %1935 = vmatmul.mubr.f32.gmra.mrb[0].mxu0 %v1830
        %v1936 = vpop.f32.mrb[0].mxu0
        %v1937 = vadd.f32 0.0, %v1936
        %v1938 = vpop.f32.mrb[0].mxu0
        %1939 = vmatprep.mubr.f32.mxu0 0.0
        %1940 = vmatmul.mubr.f32.gmra.mrb[0].mxu0 %v1831
        %v1941 = vpop.f32.mrb[0].mxu0
        %v1942 = vadd.f32 0.0, %v1941
        %v1943 = vpop.f32.mrb[0].mxu0
        %1944 = vmatprep.mubr.f32.mxu0 0.0
        %1945 = vmatmul.mubr.f32.gmra.mrb[0].mxu0 %v1832
        %v1946 = vpop.f32.mrb[0].mxu0
        %v1947 = vadd.f32 0.0, %v1946
        %v1948 = vpop.f32.mrb[0].mxu0
        %1949 = vmatprep.mubr.f32.mxu0 0.0
        %1950 = vmatmul.mubr.f32.gmra.mrb[0].mxu0 %v1833
        %v1951 = vpop.f32.mrb[0].mxu0
        %v1952 = vadd.f32 0.0, %v1951
        %v1953 = vpop.f32.mrb[0].mxu0
        %1954 = vmatprep.mubr.f32.mxu0 0.0
        %1955 = vmatmul.mubr.f32.gmra.mrb[0].mxu0 %v1834
        %v1956 = vpop.f32.mrb[0].mxu0
        %v1957 = vadd.f32 0.0, %v1956
        %v1958 = vpop.f32.mrb[0].mxu0
        %1959 = vmatprep.mubr.f32.mxu0 0.0
        %1960 = vmatmul.mubr.f32.gmra.mrb[0].mxu0 %v1835
        %v1961 = vpop.f32.mrb[0].mxu0
        %v1962 = vadd.f32 0.0, %v1961
        %v1963 = vpop.f32.mrb[0].mxu0
        %1964 = vmatprep.mubr.f32.mxu0 0.0
        %1965 = vmatmul.mubr.f32.gmra.mrb[0].mxu0 %v1836
        %v1966 = vpop.f32.mrb[0].mxu0
        %v1967 = vadd.f32 0.0, %v1966
        %v1968 = vpop.f32.mrb[0].mxu0
        %1969 = vmatprep.mubr.f32.mxu0 0.0
        %1970 = vmatmul.mubr.f32.gmra.mrb[0].mxu0 %v1837
        %v1971 = vpop.f32.mrb[0].mxu0
        %v1972 = vadd.f32 0.0, %v1971
        %v1973 = vpop.f32.mrb[0].mxu0
        %1974 = vmatprep.mubr.f32.mxu0 0.0
        %1975 = vmatmul.mubr.f32.gmra.mrb[0].mxu0 %v1838
        %v1976 = vpop.f32.mrb[0].mxu0
        %v1977 = vadd.f32 0.0, %v1976
        %v1978 = vpop.f32.mrb[0].mxu0
        %1979 = vmatprep.mubr.f32.mxu0 0.0
        %1980 = vmatmul.mubr.f32.gmra.mrb[0].mxu0 %v1839
        %v1981 = vpop.f32.mrb[0].mxu0
        %v1982 = vadd.f32 0.0, %v1981
        %v1983 = vpop.f32.mrb[0].mxu0
        %1984 = vmatprep.mubr.f32.mxu0 0.0
        %1985 = vmatmul.mubr.f32.gmra.mrb[0].mxu0 %v1840
        %v1986 = vpop.f32.mrb[0].mxu0
        %v1987 = vadd.f32 0.0, %v1986
        %v1988 = vpop.f32.mrb[0].mxu0
        %1989 = vmatprep.mubr.f32.mxu0 0.0
        %1990 = vmatmul.mubr.f32.gmra.mrb[0].mxu0 %v1841
        %v1991 = vpop.f32.mrb[0].mxu0
        %v1992 = vadd.f32 0.0, %v1991
        %v1993 = vpop.f32.mrb[0].mxu0
        %1994 = vmatprep.mubr.f32.mxu0 0.0
        %1995 = vmatmul.mubr.f32.gmra.mrb[0].mxu0 %v1842
        %v1996 = vpop.f32.mrb[0].mxu0
        %v1997 = vadd.f32 0.0, %v1996
        %v1998 = vpop.f32.mrb[0].mxu0
        %1999 = vmatprep.mubr.f32.mxu0 0.0
        %2000 = vmatmul.mubr.f32.gmra.mrb[0].mxu0 %v1843
        %v2001 = vpop.f32.mrb[0].mxu0
        %v2002 = vadd.f32 0.0, %v2001
        %v2003 = vpop.f32.mrb[0].mxu0
        %2004 = vdwg.mxu0
        %2005 = vst [vmem:[%s137] sm:$0xff] %v1927
        %2006 = vst [vmem:[%s137 + $0x8] sm:$0xff] %v1932
        %2007 = vst [vmem:[%s137 + $0x10] sm:$0xff] %v1937
        %2008 = vst [vmem:[%s137 + $0x18] sm:$0xff] %v1942
        %2009 = vst [vmem:[%s137 + $0x20] sm:$0xff] %v1947
        %2010 = vst [vmem:[%s137 + $0x28] sm:$0xff] %v1952
        %2011 = vst [vmem:[%s137 + $0x30] sm:$0xff] %v1957
        %2012 = vst [vmem:[%s137 + $0x38] sm:$0xff] %v1962
        %2013 = vst [vmem:[%s137 + $0x40] sm:$0xff] %v1967
        %2014 = vst [vmem:[%s137 + $0x48] sm:$0xff] %v1972
        %2015 = vst [vmem:[%s137 + $0x50] sm:$0xff] %v1977
        %2016 = vst [vmem:[%s137 + $0x58] sm:$0xff] %v1982
        %2017 = vst [vmem:[%s137 + $0x60] sm:$0xff] %v1987
        %2018 = vst [vmem:[%s137 + $0x68] sm:$0xff] %v1992
        %2019 = vst [vmem:[%s137 + $0x70] sm:$0xff] %v1997
        %2020 = vst [vmem:[%s137 + $0x78] sm:$0xff] %v2002
        %s2021 = sand.u32 %s71, 1
        %s2022 = scalar_lea.sflag [#allocation3], %s2021
        %s2023 = sand.u32 %s71, 1
        %s2024 = smul.addr %s2023, 128
        %s2025 = scalar_lea.vmem [#allocation2], %s2024
        // Predicated region
        $region29: #{tpu_custom_call.1} parent=27 // pred_check
          %p2026 = pneg %p81
        $region30: #{tpu_custom_call.1} parent=27 // pred_check_branch
          %2028 = sbr.rel (%p2026) target = $region32
        $region31: #{tpu_custom_call.1} parent=27 // pred_region
          %s2029 = smul.u32 16, %s16
          %s2031 = ssub.s32 2048, 2048
          %2032 = vsyncadd %s2022, %s2031
          %s2033 = smul.addr %s2029, 128
          %s2034 = scalar_lea.hbm %s2, %s2033
          %s2035 = sshll.u32 %s2025, 4
          %s2036 = int_to_ptr.vmem [resolvable:$true] %s2035
          %2041 = dma.vmem_to_hbm [thread:$0]  %s2036, 2048, %s2034, %s2022, 128, 128, 8
        $region32: #{tpu_custom_call.1} parent=27 // pred_fallthru
          _
      $region28: #{tpu_custom_call.1} parent=5 // pred_fallthru
        _
      %p2042 = scmp.le.s32.totalorder 2, %s11
      // Predicated region
      $region33: #{tpu_custom_call.1} parent=5 // pred_check
        %p2043 = pneg %p2042
      $region34: #{tpu_custom_call.1} parent=5 // pred_check_branch
        %2045 = sbr.rel (%p2043) target = $region36
      $region35: #{tpu_custom_call.1} parent=5 // pred_region
        %s2046 = ssub.s32 %s11, 2
        // Predicated region
        $region37: #{tpu_custom_call.1} parent=35 // pred_check
          %p2047 = pneg %p87
        $region38: #{tpu_custom_call.1} parent=35 // pred_check_branch
          %2049 = sbr.rel (%p2047) target = $region40
        $region39: #{tpu_custom_call.1} parent=35 // pred_region
          %s2050 = sand.u32 %s72, 1
          %s2051 = scalar_lea.sflag [#allocation3], %s2050
          %s2052 = sand.u32 %s72, 1
          %s2053 = smul.addr %s2052, 128
          %s2054 = scalar_lea.vmem [#allocation2], %s2053
          %2055 = dma.done %s2051, 2048
        $region40: #{tpu_custom_call.1} parent=35 // pred_fallthru
          _
      $region36: #{tpu_custom_call.1} parent=5 // pred_fallthru
        _
    $region6: #{tpu_custom_call.1} parent=1 // loop_footer
      %s15 = sadd.s32 1, %s11
    $region7: #{tpu_custom_call.1} parent=1 // loop_footer_branch
      %10 = sbr.rel target = $region3
    $region8: #{tpu_custom_call.1} parent=1 // loop_exit
      _
    %2056 = vsyncpa [#allocation3], 1
    %s2057 = scalar_lea.sflag [#allocation3], 1
    %2058 = vsyncpa %s2057, 1

</llo_original>
